<compile_context>
chip_gen: v7x
topology: tpu7x:2x2x1
jax: 0.10.0
libtpu: 0.0.40
codegen_flags: <defaults>
</compile_context>

<pallas_src>
import math
import numpy as np
import jax
import jax.numpy as jnp
from jax import lax
from jax.experimental import pallas as pl
from jax.experimental.pallas import tpu as pltpu

EPS = 1e-5
# MXU operand dtype (f32 accumulation).  Set to jnp.float32 for full precision.
_MM_DTYPE = jnp.bfloat16


# ----------------------------------------------------------------------------
# Fused kernel: one grid step == one batch image.
# ----------------------------------------------------------------------------
def _make_fused_kernel(H, W, Ho, Wo, C, Cout):
    h_odd = (H % 2 == 1)
    w_odd = (W % 2 == 1)
    neg_min = float(jnp.finfo(jnp.float32).min)

    def kernel(x_ref, s1_ref, b1_ref, b2_ref, s3_ref, b3_ref,
               w1_ref, w2_ref, w3_ref, o_ref, t_ref):
        # x_ref : (1, 4*Ho, Wo, C)   four 2x2 spatial phases of one image
        # o_ref : (1, Ho, Wo, 2*Cout)
        # t_ref : VMEM scratch (Ho, Wo, 9*Cout)  im2col tap matrix for conv2
        xv = x_ref[0]                                      # (4*Ho, Wo, C) f32
        xf = xv.reshape(4 * Ho * Wo, C)

        # -- branch 1 pointwise: relu(bn1(x)) -> 1x1 conv (bn2 scale folded
        #    into w1 in the wrapper) -> + bn2 bias -> relu.  (VPU work in f32.)
        h1 = jnp.maximum(xf * s1_ref[...] + b1_ref[...], 0.0)
        a = jnp.dot(h1.astype(_MM_DTYPE), w1_ref[...].astype(_MM_DTYPE),
                    preferred_element_type=jnp.float32)
        a = jnp.maximum(a + b2_ref[...], 0.0)              # (4*Ho*Wo, Cout)

        ph = a.reshape(4, Ho, Wo, Cout)                    # phase p = 2*py + px
        a00, a01, a10, a11 = ph[0], ph[1], ph[2], ph[3]
        # Odd H/W: trailing phase row/col corresponds to conv2's zero padding,
        # so zero out what the pointwise pipeline produced there.
        if h_odd:
            rmask = lax.broadcasted_iota(jnp.int32, (Ho, Wo, Cout), 0) < (Ho - 1)
            a10 = jnp.where(rmask, a10, 0.0)
            a11 = jnp.where(rmask, a11, 0.0)
        if w_odd:
            cmask = lax.broadcasted_iota(jnp.int32, (Ho, Wo, Cout), 1) < (Wo - 1)
            a01 = jnp.where(cmask, a01, 0.0)
            a11 = jnp.where(cmask, a11, 0.0)

        # -- conv2 (3x3, stride 2, pad 1) as ONE matmul with K = 9*Cout.
        # tap (ky,kx) at output (ho,wo) reads a_pad[2ho+ky-1, 2wo+kx-1, :]:
        # these are the phase arrays above, shifted by one output pixel.
        # Zero-filled scratch rows/cols realize the conv zero padding.
        t_ref[...] = jnp.zeros_like(t_ref)
        if Ho > 1 and Wo > 1:
            t_ref[1:, 1:, 0 * Cout:1 * Cout] = a11[:Ho - 1, :Wo - 1, :]   # (0,0)
        if Ho > 1:
            t_ref[1:, :, 1 * Cout:2 * Cout] = a10[:Ho - 1]                # (0,1)
            t_ref[1:, :, 2 * Cout:3 * Cout] = a11[:Ho - 1]                # (0,2)
        if Wo > 1:
            t_ref[:, 1:, 3 * Cout:4 * Cout] = a01[:, :Wo - 1, :]          # (1,0)
            t_ref[:, 1:, 6 * Cout:7 * Cout] = a11[:, :Wo - 1, :]          # (2,0)
        t_ref[:, :, 4 * Cout:5 * Cout] = a00                              # (1,1)
        t_ref[:, :, 5 * Cout:6 * Cout] = a01                              # (1,2)
        t_ref[:, :, 7 * Cout:8 * Cout] = a10                              # (2,1)
        t_ref[:, :, 8 * Cout:9 * Cout] = a11                              # (2,2)
        tcat = t_ref[...].reshape(Ho * Wo, 9 * Cout)
        out1 = jnp.dot(tcat.astype(_MM_DTYPE), w2_ref[...].astype(_MM_DTYPE),
                       preferred_element_type=jnp.float32)                # (Ho*Wo, Cout)

        # -- branch 2: ceil-mode 2x2 max-pool == elementwise max over the 4
        #    phases, then relu(bn3(.)) and a 1x1 conv.
        xp = xv.reshape(4, Ho, Wo, C)
        p0, p1, p2, p3 = xp[0], xp[1], xp[2], xp[3]
        if h_odd:
            prmask = lax.broadcasted_iota(jnp.int32, (Ho, Wo, C), 0) < (Ho - 1)
            p2 = jnp.where(prmask, p2, neg_min)
            p3 = jnp.where(prmask, p3, neg_min)
        if w_odd:
            pcmask = lax.broadcasted_iota(jnp.int32, (Ho, Wo, C), 1) < (Wo - 1)
            p1 = jnp.where(pcmask, p1, neg_min)
            p3 = jnp.where(pcmask, p3, neg_min)
        pool = jnp.maximum(jnp.maximum(p0, p1), jnp.maximum(p2, p3))
        h3 = jnp.maximum(pool.reshape(Ho * Wo, C) * s3_ref[...] + b3_ref[...], 0.0)
        out2 = jnp.dot(h3.astype(_MM_DTYPE), w3_ref[...].astype(_MM_DTYPE),
                       preferred_element_type=jnp.float32)                # (Ho*Wo, Cout)

        # -- concatenated output written once (no XLA-side concat copy).
        o_ref[0, :, :, :Cout] = out1.reshape(Ho, Wo, Cout)
        o_ref[0, :, :, Cout:] = out2.reshape(Ho, Wo, Cout)

    return kernel


# ----------------------------------------------------------------------------
# Wrapper: SingleLayer2 forward (NCHW in / NCHW out, like PyTorch)
# ----------------------------------------------------------------------------
def _fold_bn(gamma, beta, mean, var):
    s = gamma / jnp.sqrt(var + EPS)
    b = beta - mean * s
    return s, b


def single_layer2_forward(x_nchw, p):
    x = jnp.transpose(x_nchw, (0, 2, 3, 1)).astype(jnp.float32)       # NHWC
    N, H, W, C = x.shape
    Cout = p["W1"].shape[0]
    Ho, Wo = (H + 1) // 2, (W + 1) // 2

    s1, b1 = _fold_bn(p["g1"], p["be1"], p["m1"], p["v1"])            # (C,)
    s2, b2 = _fold_bn(p["g2"], p["be2"], p["m2"], p["v2"])            # (Cout,)
    s3, b3 = _fold_bn(p["g3"], p["be3"], p["m3"], p["v3"])            # (C,)

    # 1x1 conv weights as (Cin, Cout); bn2's scale folds into conv1's weight.
    w1 = p["W1"][:, :, 0, 0].T * s2[None, :]                          # (C, Cout)
    w3 = p["W3"][:, :, 0, 0].T                                        # (C, Cout)
    # conv2 weight as a single (9*Cout, Cout) matrix, tap-major (ky, kx).
    w2 = jnp.concatenate(
        [p["W2"][:, :, ky, kx].T for ky in range(3) for kx in range(3)], axis=0)

    # Single fused XLA prep copy: 2x2 spatial phase decomposition of x
    # (replaces the previous padded copy + 9x im2col + 4x pool-tap blow-up).
    xpad = jnp.pad(x, ((0, 0), (0, 2 * Ho - H), (0, 2 * Wo - W), (0, 0)))
    xph = jnp.stack([xpad[:, py::2, px::2, :] for py in (0, 1) for px in (0, 1)],
                    axis=1)                                           # (N,4,Ho,Wo,C)
    xph = xph.reshape(N, 4 * Ho, Wo, C)

    kernel = _make_fused_kernel(H, W, Ho, Wo, C, Cout)

    # VMEM budget: double-buffered in/out blocks + tap scratch + headroom,
    # clamped so it is always safe on v7x (64 MiB physical VMEM).
    lane = lambda c: ((c + 127) // 128) * 128
    est = 4 * (4 * Ho * Wo * lane(C) + Ho * Wo * lane(2 * Cout)
               + Ho * Wo * lane(9 * Cout)) * 4 + (2 << 20)
    vmem_limit = int(min(max(est, 16 << 20), 32 << 20))

    out = pl.pallas_call(
        kernel,
        out_shape=jax.ShapeDtypeStruct((N, Ho, Wo, 2 * Cout), jnp.float32),
        # Grid over batch: steps are independent ("parallel"), so v7x's two
        # TensorCores split the batch (2 steps here).  For N == 1 one would
        # tile output rows instead; not needed at these sizes.
        grid=(N,),
        in_specs=[
            pl.BlockSpec((1, 4 * Ho, Wo, C), lambda n: (n, 0, 0, 0)),   # x phases
            pl.BlockSpec((1, C), lambda n: (0, 0)),                     # s1
            pl.BlockSpec((1, C), lambda n: (0, 0)),                     # b1
            pl.BlockSpec((1, Cout), lambda n: (0, 0)),                  # b2
            pl.BlockSpec((1, C), lambda n: (0, 0)),                     # s3
            pl.BlockSpec((1, C), lambda n: (0, 0)),                     # b3
            pl.BlockSpec((C, Cout), lambda n: (0, 0)),                  # w1
            pl.BlockSpec((9 * Cout, Cout), lambda n: (0, 0)),           # w2
            pl.BlockSpec((C, Cout), lambda n: (0, 0)),                  # w3
        ],
        out_specs=pl.BlockSpec((1, Ho, Wo, 2 * Cout), lambda n: (n, 0, 0, 0)),
        scratch_shapes=[pltpu.VMEM((Ho, Wo, 9 * Cout), jnp.float32)],
        compiler_params=pltpu.CompilerParams(
            dimension_semantics=("parallel",),
            vmem_limit_bytes=vmem_limit),
    )(xph, s1[None, :], b1[None, :], b2[None, :], s3[None, :], b3[None, :],
      w1, w2, w3)

    return jnp.transpose(out, (0, 3, 1, 2))                           # NCHW


# ----------------------------------------------------------------------------
# Pure-JAX reference (NCHW, lax convs) for verification
# ----------------------------------------------------------------------------
def _bn_ref(x, g, b, m, v):
    return (x - m[None, :, None, None]) / jnp.sqrt(v[None, :, None, None] + EPS) \
        * g[None, :, None, None] + b[None, :, None, None]


def reference_forward(x, p):
    dn = ("NCHW", "OIHW", "NCHW")
    h = jax.nn.relu(_bn_ref(x, p["g1"], p["be1"], p["m1"], p["v1"]))
    o1 = lax.conv_general_dilated(h, p["W1"], (1, 1), "VALID", dimension_numbers=dn)
    h2 = jax.nn.relu(_bn_ref(o1, p["g2"], p["be2"], p["m2"], p["v2"]))
    o1 = lax.conv_general_dilated(h2, p["W2"], (2, 2), [(1, 1), (1, 1)],
                                  dimension_numbers=dn)
    H, W = x.shape[2], x.shape[3]
    ph, pw = 2 * ((H + 1) // 2) - H, 2 * ((W + 1) // 2) - W
    pool = lax.reduce_window(x, -jnp.inf, lax.max, (1, 1, 2, 2), (1, 1, 2, 2),
                             [(0, 0), (0, 0), (0, ph), (0, pw)])
    h3 = jax.nn.relu(_bn_ref(pool, p["g3"], p["be3"], p["m3"], p["v3"]))
    o2 = lax.conv_general_dilated(h3, p["W3"], (1, 1), "VALID", dimension_numbers=dn)
    return jnp.concatenate([o1, o2], axis=1)


# ----------------------------------------------------------------------------
if __name__ == "__main__":
    N, C, H, W = 2, 4, 16, 16
    Cout = 8

    key = jax.random.PRNGKey(0)
    ks = jax.random.split(key, 16)

    params = {
        # bn1 (C), bn2 (Cout), bn3 (C): gamma, beta, running_mean, running_var
        "g1": jax.random.uniform(ks[0], (C,), minval=0.5, maxval=1.5),
        "be1": 0.1 * jax.random.normal(ks[1], (C,)),
        "m1": 0.1 * jax.random.normal(ks[2], (C,)),
        "v1": jax.random.uniform(ks[3], (C,), minval=0.5, maxval=1.5),
        "g2": jax.random.uniform(ks[4], (Cout,), minval=0.5, maxval=1.5),
        "be2": 0.1 * jax.random.normal(ks[5], (Cout,)),
        "m2": 0.1 * jax.random.normal(ks[6], (Cout,)),
        "v2": jax.random.uniform(ks[7], (Cout,), minval=0.5, maxval=1.5),
        "g3": jax.random.uniform(ks[8], (C,), minval=0.5, maxval=1.5),
        "be3": 0.1 * jax.random.normal(ks[9], (C,)),
        "m3": 0.1 * jax.random.normal(ks[10], (C,)),
        "v3": jax.random.uniform(ks[11], (C,), minval=0.5, maxval=1.5),
        # conv weights in PyTorch OIHW layout
        "W1": (1.0 / math.sqrt(C)) * jax.random.normal(ks[12], (Cout, C, 1, 1)),
        "W2": (1.0 / math.sqrt(Cout * 9)) * jax.random.normal(ks[13], (Cout, Cout, 3, 3)),
        "W3": (1.0 / math.sqrt(C)) * jax.random.normal(ks[14], (Cout, C, 1, 1)),
    }
    params = {k: v.astype(jnp.float32) for k, v in params.items()}

    x = jax.random.normal(ks[15], (N, C, H, W), dtype=jnp.float32)

    fwd = jax.jit(single_layer2_forward)
    out = jax.block_until_ready(fwd(x, params))
    ref = jax.block_until_ready(reference_forward(x, params))

    assert out.shape == (N, 2 * Cout, (H + 1) // 2, (W + 1) // 2), out.shape
    # bf16 MXU operands with f32 accumulation -> slightly looser tolerance.
    np.testing.assert_allclose(np.asarray(out), np.asarray(ref),
                               rtol=2e-2, atol=2e-2)
    print("KERNEL_OK")
</pallas_src>

<mosaic_0001>
module attributes {stable_mosaic.version = 11 : i64} {
  func.func @kernel(%arg0: i32, %arg1: memref<1x32x8x4xf32, #tpu.memory_space<vmem>>, %arg2: memref<1x4xf32, #tpu.memory_space<vmem>>, %arg3: memref<1x4xf32, #tpu.memory_space<vmem>>, %arg4: memref<1x8xf32, #tpu.memory_space<vmem>>, %arg5: memref<1x4xf32, #tpu.memory_space<vmem>>, %arg6: memref<1x4xf32, #tpu.memory_space<vmem>>, %arg7: memref<4x8xf32, #tpu.memory_space<vmem>>, %arg8: memref<72x8xf32, #tpu.memory_space<vmem>>, %arg9: memref<4x8xf32, #tpu.memory_space<vmem>>, %arg10: memref<1x8x8x16xf32, #tpu.memory_space<vmem>>, %arg11: memref<8x8x72xf32, #tpu.memory_space<vmem>>) attributes {dimension_semantics = [#tpu.dimension_semantics<parallel>], iteration_bounds = array<i64: 2>, scalar_prefetch = 0 : i64, scratch_operands = 1 : i64, tpu.core_type = #tpu.core_type<tc>, window_params = [{transform_indices = @transform_0, window_bounds = array<i64: 1, 32, 8, 4>}, {pipeline_mode = #tpu.pipeline_mode<synchronous>, transform_indices = @transform_1, window_bounds = array<i64: 1, 4>}, {pipeline_mode = #tpu.pipeline_mode<synchronous>, transform_indices = @transform_2, window_bounds = array<i64: 1, 4>}, {pipeline_mode = #tpu.pipeline_mode<synchronous>, transform_indices = @transform_3, window_bounds = array<i64: 1, 8>}, {pipeline_mode = #tpu.pipeline_mode<synchronous>, transform_indices = @transform_4, window_bounds = array<i64: 1, 4>}, {pipeline_mode = #tpu.pipeline_mode<synchronous>, transform_indices = @transform_5, window_bounds = array<i64: 1, 4>}, {pipeline_mode = #tpu.pipeline_mode<synchronous>, transform_indices = @transform_6, window_bounds = array<i64: 4, 8>}, {pipeline_mode = #tpu.pipeline_mode<synchronous>, transform_indices = @transform_7, window_bounds = array<i64: 72, 8>}, {pipeline_mode = #tpu.pipeline_mode<synchronous>, transform_indices = @transform_8, window_bounds = array<i64: 4, 8>}, {transform_indices = @transform_9, window_bounds = array<i64: 1, 8, 8, 16>}]} {
    %c0 = arith.constant 0 : index
    %c0_0 = arith.constant 0 : index
    %c0_1 = arith.constant 0 : index
    %c0_2 = arith.constant 0 : index
    %0 = vector.load %arg1[%c0, %c0_0, %c0_1, %c0_2] : memref<1x32x8x4xf32, #tpu.memory_space<vmem>>, vector<1x32x8x4xf32>
    %1 = vector.shape_cast %0 : vector<1x32x8x4xf32> to vector<32x8x4xf32>
    %2 = vector.shape_cast %1 : vector<32x8x4xf32> to vector<256x4xf32>
    %c0_3 = arith.constant 0 : index
    %c0_4 = arith.constant 0 : index
    %3 = vector.load %arg2[%c0_3, %c0_4] : memref<1x4xf32, #tpu.memory_space<vmem>>, vector<1x4xf32>
    %4 = vector.broadcast %3 : vector<1x4xf32> to vector<256x4xf32>
    %5 = arith.mulf %2, %4 : vector<256x4xf32>
    %c0_5 = arith.constant 0 : index
    %c0_6 = arith.constant 0 : index
    %6 = vector.load %arg3[%c0_5, %c0_6] : memref<1x4xf32, #tpu.memory_space<vmem>>, vector<1x4xf32>
    %7 = vector.broadcast %6 : vector<1x4xf32> to vector<256x4xf32>
    %8 = arith.addf %5, %7 : vector<256x4xf32>
    %cst = arith.constant 0.000000e+00 : f32
    %9 = vector.broadcast %cst : f32 to vector<256x4xf32>
    %10 = arith.maximumf %8, %9 : vector<256x4xf32>
    %11 = arith.truncf %10 : vector<256x4xf32> to vector<256x4xbf16>
    %c0_7 = arith.constant 0 : index
    %c0_8 = arith.constant 0 : index
    %12 = vector.load %arg7[%c0_7, %c0_8] : memref<4x8xf32, #tpu.memory_space<vmem>>, vector<4x8xf32>
    %13 = arith.truncf %12 : vector<4x8xf32> to vector<4x8xbf16>
    %cst_9 = arith.constant dense<0.000000e+00> : vector<256x8xf32>
    %14 = tpu.matmul %11, %13, %cst_9 {dimension_numbers = #tpu.dot_dimension_numbers<[1], [0], [0], [1], [0, 0, 1, 1], [], []>} : vector<256x4xbf16>, vector<4x8xbf16>, vector<256x8xf32> -> vector<256x8xf32>
    %c0_10 = arith.constant 0 : index
    %c0_11 = arith.constant 0 : index
    %15 = vector.load %arg4[%c0_10, %c0_11] : memref<1x8xf32, #tpu.memory_space<vmem>>, vector<1x8xf32>
    %16 = vector.broadcast %15 : vector<1x8xf32> to vector<256x8xf32>
    %17 = arith.addf %14, %16 : vector<256x8xf32>
    %cst_12 = arith.constant 0.000000e+00 : f32
    %18 = vector.broadcast %cst_12 : f32 to vector<256x8xf32>
    %19 = arith.maximumf %17, %18 : vector<256x8xf32>
    %20 = vector.shape_cast %19 : vector<256x8xf32> to vector<4x8x8x8xf32>
    %21 = vector.extract_strided_slice %20 {offsets = [0, 0, 0, 0], sizes = [1, 8, 8, 8], strides = [1, 1, 1, 1]} : vector<4x8x8x8xf32> to vector<1x8x8x8xf32>
    %22 = vector.shape_cast %21 : vector<1x8x8x8xf32> to vector<8x8x8xf32>
    %23 = vector.extract_strided_slice %20 {offsets = [1, 0, 0, 0], sizes = [1, 8, 8, 8], strides = [1, 1, 1, 1]} : vector<4x8x8x8xf32> to vector<1x8x8x8xf32>
    %24 = vector.shape_cast %23 : vector<1x8x8x8xf32> to vector<8x8x8xf32>
    %25 = vector.extract_strided_slice %20 {offsets = [2, 0, 0, 0], sizes = [1, 8, 8, 8], strides = [1, 1, 1, 1]} : vector<4x8x8x8xf32> to vector<1x8x8x8xf32>
    %26 = vector.shape_cast %25 : vector<1x8x8x8xf32> to vector<8x8x8xf32>
    %27 = vector.extract_strided_slice %20 {offsets = [3, 0, 0, 0], sizes = [1, 8, 8, 8], strides = [1, 1, 1, 1]} : vector<4x8x8x8xf32> to vector<1x8x8x8xf32>
    %28 = vector.shape_cast %27 : vector<1x8x8x8xf32> to vector<8x8x8xf32>
    %cst_13 = arith.constant 0.000000e+00 : f32
    %29 = vector.broadcast %cst_13 : f32 to vector<8x8x72xf32>
    %c0_14 = arith.constant 0 : index
    %c0_15 = arith.constant 0 : index
    %c0_16 = arith.constant 0 : index
    %30 = vector.load %arg11[%c0_14, %c0_15, %c0_16] : memref<8x8x72xf32, #tpu.memory_space<vmem>>, vector<8x8x72xf32>
    tpu.vector_store %arg11[%c0_14, %c0_15, %c0_16], %29 {strides = array<i32>} : memref<8x8x72xf32, #tpu.memory_space<vmem>>, vector<8x8x72xf32>,
    %31 = vector.extract_strided_slice %28 {offsets = [0, 0, 0], sizes = [7, 7, 8], strides = [1, 1, 1]} : vector<8x8x8xf32> to vector<7x7x8xf32>
    %c1 = arith.constant 1 : index
    %c1_17 = arith.constant 1 : index
    %c0_18 = arith.constant 0 : index
    %32 = vector.load %arg11[%c1, %c1_17, %c0_18] : memref<8x8x72xf32, #tpu.memory_space<vmem>>, vector<7x7x8xf32>
    tpu.vector_store %arg11[%c1, %c1_17, %c0_18], %31 {strides = array<i32>} : memref<8x8x72xf32, #tpu.memory_space<vmem>>, vector<7x7x8xf32>,
    %33 = vector.extract_strided_slice %26 {offsets = [0, 0, 0], sizes = [7, 8, 8], strides = [1, 1, 1]} : vector<8x8x8xf32> to vector<7x8x8xf32>
    %c1_19 = arith.constant 1 : index
    %c0_20 = arith.constant 0 : index
    %c8 = arith.constant 8 : index
    %34 = vector.load %arg11[%c1_19, %c0_20, %c8] : memref<8x8x72xf32, #tpu.memory_space<vmem>>, vector<7x8x8xf32>
    tpu.vector_store %arg11[%c1_19, %c0_20, %c8], %33 {strides = array<i32>} : memref<8x8x72xf32, #tpu.memory_space<vmem>>, vector<7x8x8xf32>,
    %35 = vector.extract_strided_slice %28 {offsets = [0, 0, 0], sizes = [7, 8, 8], strides = [1, 1, 1]} : vector<8x8x8xf32> to vector<7x8x8xf32>
    %c1_21 = arith.constant 1 : index
    %c0_22 = arith.constant 0 : index
    %c16 = arith.constant 16 : index
    %36 = vector.load %arg11[%c1_21, %c0_22, %c16] : memref<8x8x72xf32, #tpu.memory_space<vmem>>, vector<7x8x8xf32>
    tpu.vector_store %arg11[%c1_21, %c0_22, %c16], %35 {strides = array<i32>} : memref<8x8x72xf32, #tpu.memory_space<vmem>>, vector<7x8x8xf32>,
    %37 = vector.extract_strided_slice %24 {offsets = [0, 0, 0], sizes = [8, 7, 8], strides = [1, 1, 1]} : vector<8x8x8xf32> to vector<8x7x8xf32>
    %c0_23 = arith.constant 0 : index
    %c1_24 = arith.constant 1 : index
    %c24 = arith.constant 24 : index
    %38 = vector.load %arg11[%c0_23, %c1_24, %c24] : memref<8x8x72xf32, #tpu.memory_space<vmem>>, vector<8x7x8xf32>
    tpu.vector_store %arg11[%c0_23, %c1_24, %c24], %37 {strides = array<i32>} : memref<8x8x72xf32, #tpu.memory_space<vmem>>, vector<8x7x8xf32>,
    %39 = vector.extract_strided_slice %28 {offsets = [0, 0, 0], sizes = [8, 7, 8], strides = [1, 1, 1]} : vector<8x8x8xf32> to vector<8x7x8xf32>
    %c0_25 = arith.constant 0 : index
    %c1_26 = arith.constant 1 : index
    %c48 = arith.constant 48 : index
    %40 = vector.load %arg11[%c0_25, %c1_26, %c48] : memref<8x8x72xf32, #tpu.memory_space<vmem>>, vector<8x7x8xf32>
    tpu.vector_store %arg11[%c0_25, %c1_26, %c48], %39 {strides = array<i32>} : memref<8x8x72xf32, #tpu.memory_space<vmem>>, vector<8x7x8xf32>,
    %c0_27 = arith.constant 0 : index
    %c0_28 = arith.constant 0 : index
    %c32 = arith.constant 32 : index
    %41 = vector.load %arg11[%c0_27, %c0_28, %c32] : memref<8x8x72xf32, #tpu.memory_space<vmem>>, vector<8x8x8xf32>
    tpu.vector_store %arg11[%c0_27, %c0_28, %c32], %22 {strides = array<i32>} : memref<8x8x72xf32, #tpu.memory_space<vmem>>, vector<8x8x8xf32>,
    %c0_29 = arith.constant 0 : index
    %c0_30 = arith.constant 0 : index
    %c40 = arith.constant 40 : index
    %42 = vector.load %arg11[%c0_29, %c0_30, %c40] : memref<8x8x72xf32, #tpu.memory_space<vmem>>, vector<8x8x8xf32>
    tpu.vector_store %arg11[%c0_29, %c0_30, %c40], %24 {strides = array<i32>} : memref<8x8x72xf32, #tpu.memory_space<vmem>>, vector<8x8x8xf32>,
    %c0_31 = arith.constant 0 : index
    %c0_32 = arith.constant 0 : index
    %c56 = arith.constant 56 : index
    %43 = vector.load %arg11[%c0_31, %c0_32, %c56] : memref<8x8x72xf32, #tpu.memory_space<vmem>>, vector<8x8x8xf32>
    tpu.vector_store %arg11[%c0_31, %c0_32, %c56], %26 {strides = array<i32>} : memref<8x8x72xf32, #tpu.memory_space<vmem>>, vector<8x8x8xf32>,
    %c0_33 = arith.constant 0 : index
    %c0_34 = arith.constant 0 : index
    %c64 = arith.constant 64 : index
    %44 = vector.load %arg11[%c0_33, %c0_34, %c64] : memref<8x8x72xf32, #tpu.memory_space<vmem>>, vector<8x8x8xf32>
    tpu.vector_store %arg11[%c0_33, %c0_34, %c64], %28 {strides = array<i32>} : memref<8x8x72xf32, #tpu.memory_space<vmem>>, vector<8x8x8xf32>,
    %c0_35 = arith.constant 0 : index
    %c0_36 = arith.constant 0 : index
    %c0_37 = arith.constant 0 : index
    %45 = vector.load %arg11[%c0_35, %c0_36, %c0_37] : memref<8x8x72xf32, #tpu.memory_space<vmem>>, vector<8x8x72xf32>
    %46 = vector.shape_cast %45 : vector<8x8x72xf32> to vector<64x72xf32>
    %47 = arith.truncf %46 : vector<64x72xf32> to vector<64x72xbf16>
    %c0_38 = arith.constant 0 : index
    %c0_39 = arith.constant 0 : index
    %48 = vector.load %arg8[%c0_38, %c0_39] : memref<72x8xf32, #tpu.memory_space<vmem>>, vector<72x8xf32>
    %49 = arith.truncf %48 : vector<72x8xf32> to vector<72x8xbf16>
    %cst_40 = arith.constant dense<0.000000e+00> : vector<64x8xf32>
    %50 = tpu.matmul %47, %49, %cst_40 {dimension_numbers = #tpu.dot_dimension_numbers<[1], [0], [0], [1], [0, 0, 1, 1], [], []>} : vector<64x72xbf16>, vector<72x8xbf16>, vector<64x8xf32> -> vector<64x8xf32>
    %51 = vector.shape_cast %1 : vector<32x8x4xf32> to vector<4x8x8x4xf32>
    %52 = vector.extract_strided_slice %51 {offsets = [0, 0, 0, 0], sizes = [1, 8, 8, 4], strides = [1, 1, 1, 1]} : vector<4x8x8x4xf32> to vector<1x8x8x4xf32>
    %53 = vector.shape_cast %52 : vector<1x8x8x4xf32> to vector<8x8x4xf32>
    %54 = vector.extract_strided_slice %51 {offsets = [1, 0, 0, 0], sizes = [1, 8, 8, 4], strides = [1, 1, 1, 1]} : vector<4x8x8x4xf32> to vector<1x8x8x4xf32>
    %55 = vector.shape_cast %54 : vector<1x8x8x4xf32> to vector<8x8x4xf32>
    %56 = vector.extract_strided_slice %51 {offsets = [2, 0, 0, 0], sizes = [1, 8, 8, 4], strides = [1, 1, 1, 1]} : vector<4x8x8x4xf32> to vector<1x8x8x4xf32>
    %57 = vector.shape_cast %56 : vector<1x8x8x4xf32> to vector<8x8x4xf32>
    %58 = vector.extract_strided_slice %51 {offsets = [3, 0, 0, 0], sizes = [1, 8, 8, 4], strides = [1, 1, 1, 1]} : vector<4x8x8x4xf32> to vector<1x8x8x4xf32>
    %59 = vector.shape_cast %58 : vector<1x8x8x4xf32> to vector<8x8x4xf32>
    %60 = arith.maximumf %53, %55 : vector<8x8x4xf32>
    %61 = arith.maximumf %57, %59 : vector<8x8x4xf32>
    %62 = arith.maximumf %60, %61 : vector<8x8x4xf32>
    %63 = vector.shape_cast %62 : vector<8x8x4xf32> to vector<64x4xf32>
    %c0_41 = arith.constant 0 : index
    %c0_42 = arith.constant 0 : index
    %64 = vector.load %arg5[%c0_41, %c0_42] : memref<1x4xf32, #tpu.memory_space<vmem>>, vector<1x4xf32>
    %65 = vector.broadcast %64 : vector<1x4xf32> to vector<64x4xf32>
    %66 = arith.mulf %63, %65 : vector<64x4xf32>
    %c0_43 = arith.constant 0 : index
    %c0_44 = arith.constant 0 : index
    %67 = vector.load %arg6[%c0_43, %c0_44] : memref<1x4xf32, #tpu.memory_space<vmem>>, vector<1x4xf32>
    %68 = vector.broadcast %67 : vector<1x4xf32> to vector<64x4xf32>
    %69 = arith.addf %66, %68 : vector<64x4xf32>
    %cst_45 = arith.constant 0.000000e+00 : f32
    %70 = vector.broadcast %cst_45 : f32 to vector<64x4xf32>
    %71 = arith.maximumf %69, %70 : vector<64x4xf32>
    %72 = arith.truncf %71 : vector<64x4xf32> to vector<64x4xbf16>
    %c0_46 = arith.constant 0 : index
    %c0_47 = arith.constant 0 : index
    %73 = vector.load %arg9[%c0_46, %c0_47] : memref<4x8xf32, #tpu.memory_space<vmem>>, vector<4x8xf32>
    %74 = arith.truncf %73 : vector<4x8xf32> to vector<4x8xbf16>
    %cst_48 = arith.constant dense<0.000000e+00> : vector<64x8xf32>
    %75 = tpu.matmul %72, %74, %cst_48 {dimension_numbers = #tpu.dot_dimension_numbers<[1], [0], [0], [1], [0, 0, 1, 1], [], []>} : vector<64x4xbf16>, vector<4x8xbf16>, vector<64x8xf32> -> vector<64x8xf32>
    %76 = vector.shape_cast %50 : vector<64x8xf32> to vector<8x8x8xf32>
    %c0_49 = arith.constant 0 : index
    %c0_50 = arith.constant 0 : index
    %c0_51 = arith.constant 0 : index
    %c0_52 = arith.constant 0 : index
    %77 = vector.load %arg10[%c0_49, %c0_50, %c0_51, %c0_52] : memref<1x8x8x16xf32, #tpu.memory_space<vmem>>, vector<1x8x8x8xf32>
    %78 = vector.shape_cast %77 : vector<1x8x8x8xf32> to vector<8x8x8xf32>
    %79 = vector.shape_cast %76 : vector<8x8x8xf32> to vector<1x8x8x8xf32>
    tpu.vector_store %arg10[%c0_49, %c0_50, %c0_51, %c0_52], %79 {strides = array<i32>} : memref<1x8x8x16xf32, #tpu.memory_space<vmem>>, vector<1x8x8x8xf32>,
    %80 = vector.shape_cast %75 : vector<64x8xf32> to vector<8x8x8xf32>
    %c0_53 = arith.constant 0 : index
    %c0_54 = arith.constant 0 : index
    %c0_55 = arith.constant 0 : index
    %c8_56 = arith.constant 8 : index
    %81 = vector.load %arg10[%c0_53, %c0_54, %c0_55, %c8_56] : memref<1x8x8x16xf32, #tpu.memory_space<vmem>>, vector<1x8x8x8xf32>
    %82 = vector.shape_cast %81 : vector<1x8x8x8xf32> to vector<8x8x8xf32>
    %83 = vector.shape_cast %80 : vector<8x8x8xf32> to vector<1x8x8x8xf32>
    tpu.vector_store %arg10[%c0_53, %c0_54, %c0_55, %c8_56], %83 {strides = array<i32>} : memref<1x8x8x16xf32, #tpu.memory_space<vmem>>, vector<1x8x8x8xf32>,
    return
  }
  func.func @transform_0(%arg0: i32) -> (i32, i32, i32, i32) {
    %c0_i32 = arith.constant 0 : i32
    %c0_i32_0 = arith.constant 0 : i32
    %c0_i32_1 = arith.constant 0 : i32
    %c0_i32_2 = arith.constant 0 : i32
    return %arg0, %c0_i32, %c0_i32_0, %c0_i32_1 : i32, i32, i32, i32
  }
  func.func @transform_1(%arg0: i32) -> (i32, i32) {
    %c0_i32 = arith.constant 0 : i32
    %c0_i32_0 = arith.constant 0 : i32
    %c0_i32_1 = arith.constant 0 : i32
    return %c0_i32, %c0_i32_0 : i32, i32
  }
  func.func @transform_2(%arg0: i32) -> (i32, i32) {
    %c0_i32 = arith.constant 0 : i32
    %c0_i32_0 = arith.constant 0 : i32
    %c0_i32_1 = arith.constant 0 : i32
    return %c0_i32, %c0_i32_0 : i32, i32
  }
  func.func @transform_3(%arg0: i32) -> (i32, i32) {
    %c0_i32 = arith.constant 0 : i32
    %c0_i32_0 = arith.constant 0 : i32
    %c0_i32_1 = arith.constant 0 : i32
    return %c0_i32, %c0_i32_0 : i32, i32
  }
  func.func @transform_4(%arg0: i32) -> (i32, i32) {
    %c0_i32 = arith.constant 0 : i32
    %c0_i32_0 = arith.constant 0 : i32
    %c0_i32_1 = arith.constant 0 : i32
    return %c0_i32, %c0_i32_0 : i32, i32
  }
  func.func @transform_5(%arg0: i32) -> (i32, i32) {
    %c0_i32 = arith.constant 0 : i32
    %c0_i32_0 = arith.constant 0 : i32
    %c0_i32_1 = arith.constant 0 : i32
    return %c0_i32, %c0_i32_0 : i32, i32
  }
  func.func @transform_6(%arg0: i32) -> (i32, i32) {
    %c0_i32 = arith.constant 0 : i32
    %c0_i32_0 = arith.constant 0 : i32
    %c0_i32_1 = arith.constant 0 : i32
    return %c0_i32, %c0_i32_0 : i32, i32
  }
  func.func @transform_7(%arg0: i32) -> (i32, i32) {
    %c0_i32 = arith.constant 0 : i32
    %c0_i32_0 = arith.constant 0 : i32
    %c0_i32_1 = arith.constant 0 : i32
    return %c0_i32, %c0_i32_0 : i32, i32
  }
  func.func @transform_8(%arg0: i32) -> (i32, i32) {
    %c0_i32 = arith.constant 0 : i32
    %c0_i32_0 = arith.constant 0 : i32
    %c0_i32_1 = arith.constant 0 : i32
    return %c0_i32, %c0_i32_0 : i32, i32
  }
  func.func @transform_9(%arg0: i32) -> (i32, i32, i32, i32) {
    %c0_i32 = arith.constant 0 : i32
    %c0_i32_0 = arith.constant 0 : i32
    %c0_i32_1 = arith.constant 0 : i32
    %c0_i32_2 = arith.constant 0 : i32
    return %arg0, %c0_i32, %c0_i32_0, %c0_i32_1 : i32, i32, i32, i32
  }
}

</mosaic_0001>

<llo_original>
// kernel: single_layer2_forward.1
$region0: #{single_layer2_forward.1}
  #allocation0 [shape = 'u32[]', space=smem, size = 0x4, offset = 0x4, fixed_abs, tag = 'smem constant byte address 0x4 - core index']
  #allocation1 [shape = 'u32[144,128]{1,0:T(1,128)}', space=vmem, size = 0x12000, scoped, tag = 'internal scratch']
  #allocation2 [shape = 'f32[8,8,72]{2,1,0:T(8,128)}', space=vmem, size = 0x8000, scoped, tag = 'scratch operand']
  %s0 = inlined_call_operand.vmem [shape: f32[2,32,8,4], index: 0, kind: input, shape index: {}]
  %s1 = inlined_call_operand.vmem [shape: f32[1,4], index: 1, kind: input, shape index: {}]
  %s2 = inlined_call_operand.vmem [shape: f32[1,4], index: 2, kind: input, shape index: {}]
  %s3 = inlined_call_operand.vmem [shape: f32[1,8], index: 3, kind: input, shape index: {}]
  %s4 = inlined_call_operand.vmem [shape: f32[1,4], index: 4, kind: input, shape index: {}]
  %s5 = inlined_call_operand.vmem [shape: f32[1,4], index: 5, kind: input, shape index: {}]
  %s6 = inlined_call_operand.vmem [shape: f32[4,8], index: 6, kind: input, shape index: {}]
  %s7 = inlined_call_operand.vmem [shape: f32[72,8], index: 7, kind: input, shape index: {}]
  %s8 = inlined_call_operand.vmem [shape: f32[4,8], index: 8, kind: input, shape index: {}]
  %s9 = inlined_call_operand.hbm [shape: f32[2,8,8,16], index: 9, kind: output, shape index: {}]
  %s10 = sld [smem:[#allocation0]]
  $region69: #{single_layer2_forward.1} parent=0
    _
  %s12 = ssub.s32 1, %s10
  %s13 = scalar_select 0, %s12, %s10
  $region1: #{single_layer2_forward.1} parent=0
    #allocation3 [shape = 'u8[65536]{0}', space=vmem, size = 0x10000, scoped, tag = 'output window, operand 0']
    #allocation4 [shape = 's32[2]{0}', space=sflag, size = 0x8, scoped, tag = 'scoped memory for single_layer2_forward.1']
    %14 = vsyncpa [#allocation4], 0
    %s15 = scalar_lea.sflag [#allocation4], 1
    %16 = vsyncpa %s15, 0
    loop: start=0, step=1, limit=4
    $region2: #{single_layer2_forward.1} parent=1 // loop_pre_header
      _
    $region3: #{single_layer2_forward.1} parent=1 // loop_header
      %s18 = sphi 0, %s22
      %p19 = scmp.ge.s32.totalorder %s18, 4
      %s28 = sphi 0, %s30
      %s31 = sphi 0, %s28
      %s32 = sphi 0, %s31
      %s48 = sphi 0, %s32
      %s52 = sphi 0, %s52
      %s54 = sphi 0, %s52
      %s55 = sphi 0, %s54
      %s69 = sphi 0, %s55
      %s73 = sphi 0, %s73
      %s75 = sphi 0, %s73
      %s76 = sphi 0, %s75
      %s90 = sphi 0, %s76
      %s94 = sphi 0, %s94
      %s96 = sphi 0, %s94
      %s97 = sphi 0, %s96
      %s111 = sphi 0, %s97
      %s115 = sphi 0, %s115
      %s117 = sphi 0, %s115
      %s118 = sphi 0, %s117
      %s132 = sphi 0, %s118
      %s136 = sphi 0, %s136
      %s138 = sphi 0, %s136
      %s139 = sphi 0, %s138
      %s153 = sphi 0, %s139
      %s157 = sphi 0, %s157
      %s159 = sphi 0, %s157
      %s160 = sphi 0, %s159
      %s174 = sphi 0, %s160
      %s178 = sphi 0, %s178
      %s180 = sphi 0, %s178
      %s181 = sphi 0, %s180
      %s195 = sphi 0, %s181
      %s199 = sphi 0, %s199
      %s201 = sphi 0, %s199
      %s202 = sphi 0, %s201
      %s216 = sphi 0, %s202
      %s222 = sphi 0, %s224
      %s225 = sphi 0, %s222
      %s226 = sphi 0, %s225
      %s242 = sphi 0, %s226
    $region4: #{single_layer2_forward.1} parent=1 // loop_header_branch
      %21 = sbr.rel (%p19) target = $region8
    $region5: #{single_layer2_forward.1} parent=1 // loop_body
      %s23 = ssub.s32 %s18, 1
      %s24 = ssub.s32 %s18, 2
      %s25 = sadd.s32 %s18, 1
      %s26 = ssub.s32 %s18, %s25
      %p27 = scmp.eq.s32.totalorder %s26, 0
      %s29 = sadd.s32 %s28, 1
      %s30 = scalar_select %p27, %s28, %s29
      %p33 = pneg %p27
      %p34 = scmp.eq.s32.totalorder %s18, 1
      %p35 = por %p33, %p34
      %p36 = scmp.ne.s32.totalorder %s28, %s31
      %p37 = scmp.eq.s32.totalorder %s18, 0
      %p38 = por %p36, %p37
      %p39 = scmp.ne.s32.totalorder %s28, %s31
      %p40 = scmp.eq.s32.totalorder %s23, 1
      %p41 = por %p39, %p40
      %p42 = scmp.ne.s32.totalorder %s31, %s32
      %p43 = scmp.eq.s32.totalorder %s23, 0
      %p44 = por %p42, %p43
      %p45 = scmp.ne.s32.totalorder %s31, %s32
      %p46 = scmp.eq.s32.totalorder %s24, 1
      %p47 = por %p45, %p46
      %p49 = scmp.ne.s32.totalorder %s32, %s48
      %p50 = scmp.eq.s32.totalorder %s24, 0
      %p51 = por %p49, %p50
      %s53 = sadd.s32 %s52, 1
      %p56 = scmp.eq.s32.totalorder %s18, 1
      %p57 = scmp.ne.s32.totalorder %s52, %s54
      %p58 = scmp.eq.s32.totalorder %s18, 0
      %p59 = por %p57, %p58
      %p60 = scmp.ne.s32.totalorder %s52, %s54
      %p61 = scmp.eq.s32.totalorder %s23, 1
      %p62 = por %p60, %p61
      %p63 = scmp.ne.s32.totalorder %s54, %s55
      %p64 = scmp.eq.s32.totalorder %s23, 0
      %p65 = por %p63, %p64
      %p66 = scmp.ne.s32.totalorder %s54, %s55
      %p67 = scmp.eq.s32.totalorder %s24, 1
      %p68 = por %p66, %p67
      %p70 = scmp.ne.s32.totalorder %s55, %s69
      %p71 = scmp.eq.s32.totalorder %s24, 0
      %p72 = por %p70, %p71
      %s74 = sadd.s32 %s73, 1
      %p77 = scmp.eq.s32.totalorder %s18, 1
      %p78 = scmp.ne.s32.totalorder %s73, %s75
      %p79 = scmp.eq.s32.totalorder %s18, 0
      %p80 = por %p78, %p79
      %p81 = scmp.ne.s32.totalorder %s73, %s75
      %p82 = scmp.eq.s32.totalorder %s23, 1
      %p83 = por %p81, %p82
      %p84 = scmp.ne.s32.totalorder %s75, %s76
      %p85 = scmp.eq.s32.totalorder %s23, 0
      %p86 = por %p84, %p85
      %p87 = scmp.ne.s32.totalorder %s75, %s76
      %p88 = scmp.eq.s32.totalorder %s24, 1
      %p89 = por %p87, %p88
      %p91 = scmp.ne.s32.totalorder %s76, %s90
      %p92 = scmp.eq.s32.totalorder %s24, 0
      %p93 = por %p91, %p92
      %s95 = sadd.s32 %s94, 1
      %p98 = scmp.eq.s32.totalorder %s18, 1
      %p99 = scmp.ne.s32.totalorder %s94, %s96
      %p100 = scmp.eq.s32.totalorder %s18, 0
      %p101 = por %p99, %p100
      %p102 = scmp.ne.s32.totalorder %s94, %s96
      %p103 = scmp.eq.s32.totalorder %s23, 1
      %p104 = por %p102, %p103
      %p105 = scmp.ne.s32.totalorder %s96, %s97
      %p106 = scmp.eq.s32.totalorder %s23, 0
      %p107 = por %p105, %p106
      %p108 = scmp.ne.s32.totalorder %s96, %s97
      %p109 = scmp.eq.s32.totalorder %s24, 1
      %p110 = por %p108, %p109
      %p112 = scmp.ne.s32.totalorder %s97, %s111
      %p113 = scmp.eq.s32.totalorder %s24, 0
      %p114 = por %p112, %p113
      %s116 = sadd.s32 %s115, 1
      %p119 = scmp.eq.s32.totalorder %s18, 1
      %p120 = scmp.ne.s32.totalorder %s115, %s117
      %p121 = scmp.eq.s32.totalorder %s18, 0
      %p122 = por %p120, %p121
      %p123 = scmp.ne.s32.totalorder %s115, %s117
      %p124 = scmp.eq.s32.totalorder %s23, 1
      %p125 = por %p123, %p124
      %p126 = scmp.ne.s32.totalorder %s117, %s118
      %p127 = scmp.eq.s32.totalorder %s23, 0
      %p128 = por %p126, %p127
      %p129 = scmp.ne.s32.totalorder %s117, %s118
      %p130 = scmp.eq.s32.totalorder %s24, 1
      %p131 = por %p129, %p130
      %p133 = scmp.ne.s32.totalorder %s118, %s132
      %p134 = scmp.eq.s32.totalorder %s24, 0
      %p135 = por %p133, %p134
      %s137 = sadd.s32 %s136, 1
      %p140 = scmp.eq.s32.totalorder %s18, 1
      %p141 = scmp.ne.s32.totalorder %s136, %s138
      %p142 = scmp.eq.s32.totalorder %s18, 0
      %p143 = por %p141, %p142
      %p144 = scmp.ne.s32.totalorder %s136, %s138
      %p145 = scmp.eq.s32.totalorder %s23, 1
      %p146 = por %p144, %p145
      %p147 = scmp.ne.s32.totalorder %s138, %s139
      %p148 = scmp.eq.s32.totalorder %s23, 0
      %p149 = por %p147, %p148
      %p150 = scmp.ne.s32.totalorder %s138, %s139
      %p151 = scmp.eq.s32.totalorder %s24, 1
      %p152 = por %p150, %p151
      %p154 = scmp.ne.s32.totalorder %s139, %s153
      %p155 = scmp.eq.s32.totalorder %s24, 0
      %p156 = por %p154, %p155
      %s158 = sadd.s32 %s157, 1
      %p161 = scmp.eq.s32.totalorder %s18, 1
      %p162 = scmp.ne.s32.totalorder %s157, %s159
      %p163 = scmp.eq.s32.totalorder %s18, 0
      %p164 = por %p162, %p163
      %p165 = scmp.ne.s32.totalorder %s157, %s159
      %p166 = scmp.eq.s32.totalorder %s23, 1
      %p167 = por %p165, %p166
      %p168 = scmp.ne.s32.totalorder %s159, %s160
      %p169 = scmp.eq.s32.totalorder %s23, 0
      %p170 = por %p168, %p169
      %p171 = scmp.ne.s32.totalorder %s159, %s160
      %p172 = scmp.eq.s32.totalorder %s24, 1
      %p173 = por %p171, %p172
      %p175 = scmp.ne.s32.totalorder %s160, %s174
      %p176 = scmp.eq.s32.totalorder %s24, 0
      %p177 = por %p175, %p176
      %s179 = sadd.s32 %s178, 1
      %p182 = scmp.eq.s32.totalorder %s18, 1
      %p183 = scmp.ne.s32.totalorder %s178, %s180
      %p184 = scmp.eq.s32.totalorder %s18, 0
      %p185 = por %p183, %p184
      %p186 = scmp.ne.s32.totalorder %s178, %s180
      %p187 = scmp.eq.s32.totalorder %s23, 1
      %p188 = por %p186, %p187
      %p189 = scmp.ne.s32.totalorder %s180, %s181
      %p190 = scmp.eq.s32.totalorder %s23, 0
      %p191 = por %p189, %p190
      %p192 = scmp.ne.s32.totalorder %s180, %s181
      %p193 = scmp.eq.s32.totalorder %s24, 1
      %p194 = por %p192, %p193
      %p196 = scmp.ne.s32.totalorder %s181, %s195
      %p197 = scmp.eq.s32.totalorder %s24, 0
      %p198 = por %p196, %p197
      %s200 = sadd.s32 %s199, 1
      %p203 = scmp.eq.s32.totalorder %s18, 1
      %p204 = scmp.ne.s32.totalorder %s199, %s201
      %p205 = scmp.eq.s32.totalorder %s18, 0
      %p206 = por %p204, %p205
      %p207 = scmp.ne.s32.totalorder %s199, %s201
      %p208 = scmp.eq.s32.totalorder %s23, 1
      %p209 = por %p207, %p208
      %p210 = scmp.ne.s32.totalorder %s201, %s202
      %p211 = scmp.eq.s32.totalorder %s23, 0
      %p212 = por %p210, %p211
      %p213 = scmp.ne.s32.totalorder %s201, %s202
      %p214 = scmp.eq.s32.totalorder %s24, 1
      %p215 = por %p213, %p214
      %p217 = scmp.ne.s32.totalorder %s202, %s216
      %p218 = scmp.eq.s32.totalorder %s24, 0
      %p219 = por %p217, %p218
      %s220 = ssub.s32 %s18, %s25
      %p221 = scmp.eq.s32.totalorder %s220, 0
      %s223 = sadd.s32 %s222, 1
      %s224 = scalar_select %p221, %s222, %s223
      %p227 = pneg %p221
      %p228 = scmp.eq.s32.totalorder %s18, 1
      %p229 = por %p227, %p228
      %p230 = scmp.ne.s32.totalorder %s222, %s225
      %p231 = scmp.eq.s32.totalorder %s18, 0
      %p232 = por %p230, %p231
      %p233 = scmp.ne.s32.totalorder %s222, %s225
      %p234 = scmp.eq.s32.totalorder %s23, 1
      %p235 = por %p233, %p234
      %p236 = scmp.ne.s32.totalorder %s225, %s226
      %p237 = scmp.eq.s32.totalorder %s23, 0
      %p238 = por %p236, %p237
      %p239 = scmp.ne.s32.totalorder %s225, %s226
      %p240 = scmp.eq.s32.totalorder %s24, 1
      %p241 = por %p239, %p240
      %p243 = scmp.ne.s32.totalorder %s226, %s242
      %p244 = scmp.eq.s32.totalorder %s24, 0
      %p245 = por %p243, %p244
      %p246 = scmp.le.s32.totalorder 1, %s18
      %p247 = scmp.lt.s32.totalorder %s18, 3
      %p248 = pnand %p246, %p247
      %p249 = pneg %p248
      // Predicated region
      $region9: #{single_layer2_forward.1} parent=5 // pred_check
        _
      $region10: #{single_layer2_forward.1} parent=5 // pred_check_branch
        %251 = sbr.rel (%p248) target = $region12
      $region11: #{single_layer2_forward.1} parent=5 // pred_region
        %s252 = ssub.s32 %s18, 1
        // Predicated region
        $region13: #{single_layer2_forward.1} parent=11 // pred_check
          %p253 = pneg %p65
        $region14: #{single_layer2_forward.1} parent=11 // pred_check_branch
          %255 = sbr.rel (%p253) target = $region16
        $region15: #{single_layer2_forward.1} parent=11 // pred_region
          _
        $region16: #{single_layer2_forward.1} parent=11 // pred_fallthru
          _
        // Predicated region
        $region17: #{single_layer2_forward.1} parent=11 // pred_check
          %p256 = pneg %p86
        $region18: #{single_layer2_forward.1} parent=11 // pred_check_branch
          %258 = sbr.rel (%p256) target = $region20
        $region19: #{single_layer2_forward.1} parent=11 // pred_region
          _
        $region20: #{single_layer2_forward.1} parent=11 // pred_fallthru
          _
        // Predicated region
        $region21: #{single_layer2_forward.1} parent=11 // pred_check
          %p259 = pneg %p107
        $region22: #{single_layer2_forward.1} parent=11 // pred_check_branch
          %261 = sbr.rel (%p259) target = $region24
        $region23: #{single_layer2_forward.1} parent=11 // pred_region
          _
        $region24: #{single_layer2_forward.1} parent=11 // pred_fallthru
          _
        // Predicated region
        $region25: #{single_layer2_forward.1} parent=11 // pred_check
          %p262 = pneg %p128
        $region26: #{single_layer2_forward.1} parent=11 // pred_check_branch
          %264 = sbr.rel (%p262) target = $region28
        $region27: #{single_layer2_forward.1} parent=11 // pred_region
          _
        $region28: #{single_layer2_forward.1} parent=11 // pred_fallthru
          _
        // Predicated region
        $region29: #{single_layer2_forward.1} parent=11 // pred_check
          %p265 = pneg %p149
        $region30: #{single_layer2_forward.1} parent=11 // pred_check_branch
          %267 = sbr.rel (%p265) target = $region32
        $region31: #{single_layer2_forward.1} parent=11 // pred_region
          _
        $region32: #{single_layer2_forward.1} parent=11 // pred_fallthru
          _
        // Predicated region
        $region33: #{single_layer2_forward.1} parent=11 // pred_check
          %p268 = pneg %p170
        $region34: #{single_layer2_forward.1} parent=11 // pred_check_branch
          %270 = sbr.rel (%p268) target = $region36
        $region35: #{single_layer2_forward.1} parent=11 // pred_region
          _
        $region36: #{single_layer2_forward.1} parent=11 // pred_fallthru
          _
        // Predicated region
        $region37: #{single_layer2_forward.1} parent=11 // pred_check
          %p271 = pneg %p191
        $region38: #{single_layer2_forward.1} parent=11 // pred_check_branch
          %273 = sbr.rel (%p271) target = $region40
        $region39: #{single_layer2_forward.1} parent=11 // pred_region
          _
        $region40: #{single_layer2_forward.1} parent=11 // pred_fallthru
          _
        // Predicated region
        $region41: #{single_layer2_forward.1} parent=11 // pred_check
          %p274 = pneg %p212
        $region42: #{single_layer2_forward.1} parent=11 // pred_check_branch
          %276 = sbr.rel (%p274) target = $region44
        $region43: #{single_layer2_forward.1} parent=11 // pred_region
          _
        $region44: #{single_layer2_forward.1} parent=11 // pred_fallthru
          _
      $region12: #{single_layer2_forward.1} parent=5 // pred_fallthru
        _
      %p277 = scmp.lt.s32.totalorder %s18, 2
      // Predicated region
      $region45: #{single_layer2_forward.1} parent=5 // pred_check
        %p278 = pneg %p277
      $region46: #{single_layer2_forward.1} parent=5 // pred_check_branch
        %280 = sbr.rel (%p278) target = $region48
      $region47: #{single_layer2_forward.1} parent=5 // pred_region
        // Predicated region
        $region49: #{single_layer2_forward.1} parent=47 // pred_check
          %p281 = pneg %p38
        $region50: #{single_layer2_forward.1} parent=47 // pred_check_branch
          %283 = sbr.rel (%p281) target = $region52
        $region51: #{single_layer2_forward.1} parent=47 // pred_region
          %p284 = scmp.lt.s32.totalorder %s18, 1
          %s285 = scalar_select %p284, %s18, 1
          %s286 = smul.addr %s285, 32
          %s287 = smul.addr %s286, 8
          %s288 = scalar_lea.vmem %s0, %s287
        $region52: #{single_layer2_forward.1} parent=47 // pred_fallthru
          _
      $region48: #{single_layer2_forward.1} parent=5 // pred_fallthru
        _
      %p289 = scmp.le.s32.totalorder 1, %s18
      %p290 = scmp.lt.s32.totalorder %s18, 3
      %p291 = pnand %p289, %p290
      %p292 = pneg %p291
      // Predicated region
      $region53: #{single_layer2_forward.1} parent=5 // pred_check
        _
      $region54: #{single_layer2_forward.1} parent=5 // pred_check_branch
        %294 = sbr.rel (%p291) target = $region56
      $region55: #{single_layer2_forward.1} parent=5 // pred_region
        %s295 = ssub.s32 %s18, 1
        %p296 = scmp.lt.s32.totalorder %s23, 1
        %s297 = scalar_select %p296, %s23, 1
        %s298 = smul.addr %s297, 32
        %s299 = smul.addr %s298, 8
        %s300 = scalar_lea.vmem %s0, %s299
        %p301 = pneg %p44
        %p302 = pneg %p41
        %p303 = pneg %p65
        %p304 = pneg %p62
        %p305 = pneg %p86
        %p306 = pneg %p83
        %p307 = pneg %p107
        %p308 = pneg %p104
        %p309 = pneg %p128
        %p310 = pneg %p125
        %p311 = pneg %p149
        %p312 = pneg %p146
        %p313 = pneg %p170
        %p314 = pneg %p167
        %p315 = pneg %p191
        %p316 = pneg %p188
        %p317 = pneg %p212
        %p318 = pneg %p209
        %p319 = pneg %p238
        %p320 = pneg %p235
        %s321 = sand.u32 %s225, 1
        %s322 = scalar_lea.sflag [#allocation4], %s321
        %s323 = sand.u32 %s225, 1
        %s324 = smul.addr %s323, 64
        %s325 = scalar_lea.vmem [#allocation3], %s324
        %p326 = scmp.lt.s32.totalorder %s23, 1
        %s327 = scalar_select %p326, %s23, 1
        %s328 = smul.addr %s327, 32
        %s329 = smul.addr %s328, 8
        %s330 = scalar_lea.vmem %s0, %s329
        %v332 = vld [vmem:[%s330] sm:$0xff]
        %v333 = vld [vmem:[%s330 + $0x8] sm:$0xff]
        %v334 = vld [vmem:[%s330 + $0x10] sm:$0xff]
        %v335 = vld [vmem:[%s330 + $0x18] sm:$0xff]
        %v336 = vld [vmem:[%s330 + $0x20] sm:$0xff]
        %v337 = vld [vmem:[%s330 + $0x28] sm:$0xff]
        %v338 = vld [vmem:[%s330 + $0x30] sm:$0xff]
        %v339 = vld [vmem:[%s330 + $0x38] sm:$0xff]
        %v340 = vld [vmem:[%s330 + $0x40] sm:$0xff]
        %v341 = vld [vmem:[%s330 + $0x48] sm:$0xff]
        %v342 = vld [vmem:[%s330 + $0x50] sm:$0xff]
        %v343 = vld [vmem:[%s330 + $0x58] sm:$0xff]
        %v344 = vld [vmem:[%s330 + $0x60] sm:$0xff]
        %v345 = vld [vmem:[%s330 + $0x68] sm:$0xff]
        %v346 = vld [vmem:[%s330 + $0x70] sm:$0xff]
        %v347 = vld [vmem:[%s330 + $0x78] sm:$0xff]
        %v348 = vld [vmem:[%s330 + $0x80] sm:$0xff]
        %v349 = vld [vmem:[%s330 + $0x88] sm:$0xff]
        %v350 = vld [vmem:[%s330 + $0x90] sm:$0xff]
        %v351 = vld [vmem:[%s330 + $0x98] sm:$0xff]
        %v352 = vld [vmem:[%s330 + $0xa0] sm:$0xff]
        %v353 = vld [vmem:[%s330 + $0xa8] sm:$0xff]
        %v354 = vld [vmem:[%s330 + $0xb0] sm:$0xff]
        %v355 = vld [vmem:[%s330 + $0xb8] sm:$0xff]
        %v356 = vld [vmem:[%s330 + $0xc0] sm:$0xff]
        %v357 = vld [vmem:[%s330 + $0xc8] sm:$0xff]
        %v358 = vld [vmem:[%s330 + $0xd0] sm:$0xff]
        %v359 = vld [vmem:[%s330 + $0xd8] sm:$0xff]
        %v360 = vld [vmem:[%s330 + $0xe0] sm:$0xff]
        %v361 = vld [vmem:[%s330 + $0xe8] sm:$0xff]
        %v362 = vld [vmem:[%s330 + $0xf0] sm:$0xff]
        %v363 = vld [vmem:[%s330 + $0xf8] sm:$0xff]
        %v364 = vld [vmem:[%s1] sm:$0x1]
        %v366 = vlaneseq
        %v367 = vshrl.u32 %v366, 7
        %v368 = vsub.s32 0, %v367
        %v369 = vrot.slane %v364, %v368
        %v371 = vmul.f32 %v332, %v369
        %v372 = vmul.f32 %v333, %v369
        %v373 = vmul.f32 %v334, %v369
        %v374 = vmul.f32 %v335, %v369
        %v375 = vmul.f32 %v336, %v369
        %v376 = vmul.f32 %v337, %v369
        %v377 = vmul.f32 %v338, %v369
        %v378 = vmul.f32 %v339, %v369
        %v379 = vmul.f32 %v340, %v369
        %v380 = vmul.f32 %v341, %v369
        %v381 = vmul.f32 %v342, %v369
        %v382 = vmul.f32 %v343, %v369
        %v383 = vmul.f32 %v344, %v369
        %v384 = vmul.f32 %v345, %v369
        %v385 = vmul.f32 %v346, %v369
        %v386 = vmul.f32 %v347, %v369
        %v387 = vmul.f32 %v348, %v369
        %v388 = vmul.f32 %v349, %v369
        %v389 = vmul.f32 %v350, %v369
        %v390 = vmul.f32 %v351, %v369
        %v391 = vmul.f32 %v352, %v369
        %v392 = vmul.f32 %v353, %v369
        %v393 = vmul.f32 %v354, %v369
        %v394 = vmul.f32 %v355, %v369
        %v395 = vmul.f32 %v356, %v369
        %v396 = vmul.f32 %v357, %v369
        %v397 = vmul.f32 %v358, %v369
        %v398 = vmul.f32 %v359, %v369
        %v399 = vmul.f32 %v360, %v369
        %v400 = vmul.f32 %v361, %v369
        %v401 = vmul.f32 %v362, %v369
        %v402 = vmul.f32 %v363, %v369
        %v403 = vld [vmem:[%s2] sm:$0x1]
        %v405 = vlaneseq
        %v406 = vshrl.u32 %v405, 7
        %v407 = vsub.s32 0, %v406
        %v408 = vrot.slane %v403, %v407
        %v410 = vadd.f32 %v371, %v408
        %v411 = vadd.f32 %v372, %v408
        %v412 = vadd.f32 %v373, %v408
        %v413 = vadd.f32 %v374, %v408
        %v414 = vadd.f32 %v375, %v408
        %v415 = vadd.f32 %v376, %v408
        %v416 = vadd.f32 %v377, %v408
        %v417 = vadd.f32 %v378, %v408
        %v418 = vadd.f32 %v379, %v408
        %v419 = vadd.f32 %v380, %v408
        %v420 = vadd.f32 %v381, %v408
        %v421 = vadd.f32 %v382, %v408
        %v422 = vadd.f32 %v383, %v408
        %v423 = vadd.f32 %v384, %v408
        %v424 = vadd.f32 %v385, %v408
        %v425 = vadd.f32 %v386, %v408
        %v426 = vadd.f32 %v387, %v408
        %v427 = vadd.f32 %v388, %v408
        %v428 = vadd.f32 %v389, %v408
        %v429 = vadd.f32 %v390, %v408
        %v430 = vadd.f32 %v391, %v408
        %v431 = vadd.f32 %v392, %v408
        %v432 = vadd.f32 %v393, %v408
        %v433 = vadd.f32 %v394, %v408
        %v434 = vadd.f32 %v395, %v408
        %v435 = vadd.f32 %v396, %v408
        %v436 = vadd.f32 %v397, %v408
        %v437 = vadd.f32 %v398, %v408
        %v438 = vadd.f32 %v399, %v408
        %v439 = vadd.f32 %v400, %v408
        %v440 = vadd.f32 %v401, %v408
        %v441 = vadd.f32 %v402, %v408
        %v442 = vmax.f32 %v410, 0.0
        %v443 = vmax.f32 %v411, 0.0
        %v444 = vmax.f32 %v412, 0.0
        %v445 = vmax.f32 %v413, 0.0
        %v446 = vmax.f32 %v414, 0.0
        %v447 = vmax.f32 %v415, 0.0
        %v448 = vmax.f32 %v416, 0.0
        %v449 = vmax.f32 %v417, 0.0
        %v450 = vmax.f32 %v418, 0.0
        %v451 = vmax.f32 %v419, 0.0
        %v452 = vmax.f32 %v420, 0.0
        %v453 = vmax.f32 %v421, 0.0
        %v454 = vmax.f32 %v422, 0.0
        %v455 = vmax.f32 %v423, 0.0
        %v456 = vmax.f32 %v424, 0.0
        %v457 = vmax.f32 %v425, 0.0
        %v458 = vmax.f32 %v426, 0.0
        %v459 = vmax.f32 %v427, 0.0
        %v460 = vmax.f32 %v428, 0.0
        %v461 = vmax.f32 %v429, 0.0
        %v462 = vmax.f32 %v430, 0.0
        %v463 = vmax.f32 %v431, 0.0
        %v464 = vmax.f32 %v432, 0.0
        %v465 = vmax.f32 %v433, 0.0
        %v466 = vmax.f32 %v434, 0.0
        %v467 = vmax.f32 %v435, 0.0
        %v468 = vmax.f32 %v436, 0.0
        %v469 = vmax.f32 %v437, 0.0
        %v470 = vmax.f32 %v438, 0.0
        %v471 = vmax.f32 %v439, 0.0
        %v472 = vmax.f32 %v440, 0.0
        %v473 = vmax.f32 %v441, 0.0
        %v474 = vpack.c.bf16 %v443, %v442
        %v475 = vpack.c.bf16 %v445, %v444
        %v476 = vpack.c.bf16 %v447, %v446
        %v477 = vpack.c.bf16 %v449, %v448
        %v478 = vpack.c.bf16 %v451, %v450
        %v479 = vpack.c.bf16 %v453, %v452
        %v480 = vpack.c.bf16 %v455, %v454
        %v481 = vpack.c.bf16 %v457, %v456
        %v482 = vpack.c.bf16 %v459, %v458
        %v483 = vpack.c.bf16 %v461, %v460
        %v484 = vpack.c.bf16 %v463, %v462
        %v485 = vpack.c.bf16 %v465, %v464
        %v486 = vpack.c.bf16 %v467, %v466
        %v487 = vpack.c.bf16 %v469, %v468
        %v488 = vpack.c.bf16 %v471, %v470
        %v489 = vpack.c.bf16 %v473, %v472
        %v490 = vld [vmem:[%s6] sm:$0xf]
        %v491 = vpack.c.bf16 %v490, %v490
        %v492 = vld [vmem:[%s3] sm:$0x1]
        %v494 = vlaneseq
        %v495 = vshrl.u32 %v494, 7
        %v496 = vsub.s32 0, %v495
        %v497 = vrot.slane %v492, %v496
        %vm499 = vcmask 31744
        %v501 = vsel %vm499, %v474, 0
        %v504 = vsel %vm499, %v475, 0
        %v507 = vsel %vm499, %v476, 0
        %v510 = vsel %vm499, %v477, 0
        %v513 = vsel %vm499, %v478, 0
        %v516 = vsel %vm499, %v479, 0
        %v519 = vsel %vm499, %v480, 0
        %v522 = vsel %vm499, %v481, 0
        %v525 = vsel %vm499, %v482, 0
        %v528 = vsel %vm499, %v483, 0
        %v531 = vsel %vm499, %v484, 0
        %v534 = vsel %vm499, %v485, 0
        %v537 = vsel %vm499, %v486, 0
        %v540 = vsel %vm499, %v487, 0
        %v543 = vsel %vm499, %v488, 0
        %v546 = vsel %vm499, %v489, 0
        %vm548 = vcmask 1041408
        %v550 = vsel %vm548, %v491, 0
        %552 = vmatprep.subr.bf16.mxu0 0
        %553 = vmatpush1.bf16.msra.mxu0 %v550
        %554 = vmatprep.subr.bf16.mxu0 0
        %555 = vmatpush1.bf16.msra.mxu0 0
        %556 = vmatprep.subr.bf16.mxu0 0
        %557 = vmatpush1.bf16.msra.mxu0 0
        %558 = vmatprep.subr.bf16.mxu0 0
        %559 = vmatpush1.bf16.msra.mxu0 0
        %560 = vmatprep.subr.bf16.mxu0 0
        %561 = vmatpush1.bf16.msra.mxu0 0
        %562 = vmatprep.subr.bf16.mxu0 0
        %563 = vmatpush1.bf16.msra.mxu0 0
        %564 = vmatprep.subr.bf16.mxu0 0
        %565 = vmatpush1.bf16.msra.mxu0 0
        %566 = vmatprep.subr.bf16.mxu0 0
        %567 = vmatpush1.bf16.msra.mxu0 0
        %568 = vmatprep.subr.bf16.mxu0 0
        %569 = vmatpush1.bf16.msra.mxu0 0
        %570 = vmatprep.subr.bf16.mxu0 0
        %571 = vmatpush1.bf16.msra.mxu0 0
        %572 = vmatprep.subr.bf16.mxu0 0
        %573 = vmatpush1.bf16.msra.mxu0 0
        %574 = vmatprep.subr.bf16.mxu0 0
        %575 = vmatpush1.bf16.msra.mxu0 0
        %576 = vmatprep.subr.bf16.mxu0 0
        %577 = vmatpush1.bf16.msra.mxu0 0
        %578 = vmatprep.subr.bf16.mxu0 0
        %579 = vmatpush1.bf16.msra.mxu0 0
        %580 = vmatprep.subr.bf16.mxu0 0
        %581 = vmatpush1.bf16.msra.mxu0 0
        %582 = vmatprep.subr.bf16.mxu0 0
        %583 = vmatpush1.bf16.msra.mxu0 0
        %584 = vmatprep.mubr.bf16.mxu0 0
        %585 = vmatmul.mubr.bf16.gmra.mrb[0].mxu0 %v501
        %v586 = vpop.f32.mrb[0].mxu0
        %v587 = vadd.f32 %v497, %v586
        %v588 = vpop.f32.mrb[0].mxu0
        %v589 = vpop.f32.mrb[0].mxu0
        %v590 = vadd.f32 %v497, %v589
        %v591 = vpop.f32.mrb[0].mxu0
        %592 = vmatprep.mubr.bf16.mxu0 0
        %593 = vmatmul.mubr.bf16.gmra.mrb[0].mxu0 %v504
        %v594 = vpop.f32.mrb[0].mxu0
        %v595 = vadd.f32 %v497, %v594
        %v596 = vpop.f32.mrb[0].mxu0
        %v597 = vpop.f32.mrb[0].mxu0
        %v598 = vadd.f32 %v497, %v597
        %v599 = vpop.f32.mrb[0].mxu0
        %600 = vmatprep.mubr.bf16.mxu0 0
        %601 = vmatmul.mubr.bf16.gmra.mrb[0].mxu0 %v507
        %v602 = vpop.f32.mrb[0].mxu0
        %v603 = vadd.f32 %v497, %v602
        %v604 = vpop.f32.mrb[0].mxu0
        %v605 = vpop.f32.mrb[0].mxu0
        %v606 = vadd.f32 %v497, %v605
        %v607 = vpop.f32.mrb[0].mxu0
        %608 = vmatprep.mubr.bf16.mxu0 0
        %609 = vmatmul.mubr.bf16.gmra.mrb[0].mxu0 %v510
        %v610 = vpop.f32.mrb[0].mxu0
        %v611 = vadd.f32 %v497, %v610
        %v612 = vpop.f32.mrb[0].mxu0
        %v613 = vpop.f32.mrb[0].mxu0
        %v614 = vadd.f32 %v497, %v613
        %v615 = vpop.f32.mrb[0].mxu0
        %616 = vmatprep.mubr.bf16.mxu0 0
        %617 = vmatmul.mubr.bf16.gmra.mrb[0].mxu0 %v513
        %v618 = vpop.f32.mrb[0].mxu0
        %v619 = vadd.f32 %v497, %v618
        %v620 = vpop.f32.mrb[0].mxu0
        %v621 = vpop.f32.mrb[0].mxu0
        %v622 = vadd.f32 %v497, %v621
        %v623 = vpop.f32.mrb[0].mxu0
        %624 = vmatprep.mubr.bf16.mxu0 0
        %625 = vmatmul.mubr.bf16.gmra.mrb[0].mxu0 %v516
        %v626 = vpop.f32.mrb[0].mxu0
        %v627 = vadd.f32 %v497, %v626
        %v628 = vpop.f32.mrb[0].mxu0
        %v629 = vpop.f32.mrb[0].mxu0
        %v630 = vadd.f32 %v497, %v629
        %v631 = vpop.f32.mrb[0].mxu0
        %632 = vmatprep.mubr.bf16.mxu0 0
        %633 = vmatmul.mubr.bf16.gmra.mrb[0].mxu0 %v519
        %v634 = vpop.f32.mrb[0].mxu0
        %v635 = vadd.f32 %v497, %v634
        %v636 = vpop.f32.mrb[0].mxu0
        %v637 = vpop.f32.mrb[0].mxu0
        %v638 = vadd.f32 %v497, %v637
        %v639 = vpop.f32.mrb[0].mxu0
        %640 = vmatprep.mubr.bf16.mxu0 0
        %641 = vmatmul.mubr.bf16.gmra.mrb[0].mxu0 %v522
        %v642 = vpop.f32.mrb[0].mxu0
        %v643 = vadd.f32 %v497, %v642
        %v644 = vpop.f32.mrb[0].mxu0
        %v645 = vpop.f32.mrb[0].mxu0
        %v646 = vadd.f32 %v497, %v645
        %v647 = vpop.f32.mrb[0].mxu0
        %648 = vmatprep.mubr.bf16.mxu0 0
        %649 = vmatmul.mubr.bf16.gmra.mrb[0].mxu0 %v525
        %v650 = vpop.f32.mrb[0].mxu0
        %v651 = vadd.f32 %v497, %v650
        %v652 = vpop.f32.mrb[0].mxu0
        %v653 = vpop.f32.mrb[0].mxu0
        %v654 = vadd.f32 %v497, %v653
        %v655 = vpop.f32.mrb[0].mxu0
        %656 = vmatprep.mubr.bf16.mxu0 0
        %657 = vmatmul.mubr.bf16.gmra.mrb[0].mxu0 %v528
        %v658 = vpop.f32.mrb[0].mxu0
        %v659 = vadd.f32 %v497, %v658
        %v660 = vpop.f32.mrb[0].mxu0
        %v661 = vpop.f32.mrb[0].mxu0
        %v662 = vadd.f32 %v497, %v661
        %v663 = vpop.f32.mrb[0].mxu0
        %664 = vmatprep.mubr.bf16.mxu0 0
        %665 = vmatmul.mubr.bf16.gmra.mrb[0].mxu0 %v531
        %v666 = vpop.f32.mrb[0].mxu0
        %v667 = vadd.f32 %v497, %v666
        %v668 = vpop.f32.mrb[0].mxu0
        %v669 = vpop.f32.mrb[0].mxu0
        %v670 = vadd.f32 %v497, %v669
        %v671 = vpop.f32.mrb[0].mxu0
        %672 = vmatprep.mubr.bf16.mxu0 0
        %673 = vmatmul.mubr.bf16.gmra.mrb[0].mxu0 %v534
        %v674 = vpop.f32.mrb[0].mxu0
        %v675 = vadd.f32 %v497, %v674
        %v676 = vpop.f32.mrb[0].mxu0
        %v677 = vpop.f32.mrb[0].mxu0
        %v678 = vadd.f32 %v497, %v677
        %v679 = vpop.f32.mrb[0].mxu0
        %680 = vmatprep.mubr.bf16.mxu0 0
        %681 = vmatmul.mubr.bf16.gmra.mrb[0].mxu0 %v537
        %v682 = vpop.f32.mrb[0].mxu0
        %v683 = vadd.f32 %v497, %v682
        %v684 = vpop.f32.mrb[0].mxu0
        %v685 = vpop.f32.mrb[0].mxu0
        %v686 = vadd.f32 %v497, %v685
        %v687 = vpop.f32.mrb[0].mxu0
        %688 = vmatprep.mubr.bf16.mxu0 0
        %689 = vmatmul.mubr.bf16.gmra.mrb[0].mxu0 %v540
        %v690 = vpop.f32.mrb[0].mxu0
        %v691 = vadd.f32 %v497, %v690
        %v692 = vpop.f32.mrb[0].mxu0
        %v693 = vpop.f32.mrb[0].mxu0
        %v694 = vadd.f32 %v497, %v693
        %v695 = vpop.f32.mrb[0].mxu0
        %696 = vmatprep.mubr.bf16.mxu0 0
        %697 = vmatmul.mubr.bf16.gmra.mrb[0].mxu0 %v543
        %v698 = vpop.f32.mrb[0].mxu0
        %v699 = vadd.f32 %v497, %v698
        %v700 = vpop.f32.mrb[0].mxu0
        %v701 = vpop.f32.mrb[0].mxu0
        %v702 = vadd.f32 %v497, %v701
        %v703 = vpop.f32.mrb[0].mxu0
        %704 = vmatprep.mubr.bf16.mxu0 0
        %705 = vmatmul.mubr.bf16.gmra.mrb[0].mxu0 %v546
        %v706 = vpop.f32.mrb[0].mxu0
        %v707 = vadd.f32 %v497, %v706
        %v708 = vpop.f32.mrb[0].mxu0
        %v709 = vpop.f32.mrb[0].mxu0
        %v710 = vadd.f32 %v497, %v709
        %v711 = vpop.f32.mrb[0].mxu0
        %712 = vdwg.mxu0
        %v713 = vmax.f32 %v587, 0.0
        %v714 = vmax.f32 %v590, 0.0
        %v715 = vmax.f32 %v595, 0.0
        %v716 = vmax.f32 %v598, 0.0
        %v717 = vmax.f32 %v603, 0.0
        %v718 = vmax.f32 %v606, 0.0
        %v719 = vmax.f32 %v611, 0.0
        %v720 = vmax.f32 %v614, 0.0
        %v721 = vmax.f32 %v619, 0.0
        %v722 = vmax.f32 %v622, 0.0
        %v723 = vmax.f32 %v627, 0.0
        %v724 = vmax.f32 %v630, 0.0
        %v725 = vmax.f32 %v635, 0.0
        %v726 = vmax.f32 %v638, 0.0
        %v727 = vmax.f32 %v643, 0.0
        %v728 = vmax.f32 %v646, 0.0
        %v729 = vmax.f32 %v651, 0.0
        %v730 = vmax.f32 %v654, 0.0
        %v731 = vmax.f32 %v659, 0.0
        %v732 = vmax.f32 %v662, 0.0
        %v733 = vmax.f32 %v667, 0.0
        %v734 = vmax.f32 %v670, 0.0
        %v735 = vmax.f32 %v675, 0.0
        %v736 = vmax.f32 %v678, 0.0
        %v737 = vmax.f32 %v683, 0.0
        %v738 = vmax.f32 %v686, 0.0
        %v739 = vmax.f32 %v691, 0.0
        %v740 = vmax.f32 %v694, 0.0
        %v741 = vmax.f32 %v699, 0.0
        %v742 = vmax.f32 %v702, 0.0
        %v743 = vmax.f32 %v707, 0.0
        %v744 = vmax.f32 %v710, 0.0
        %vm745 = vcmask 588800
        %746 = vst.msk [vmem:[#allocation2] sm:$0xff] %vm745, 0.0
        %747 = vst.msk [vmem:[#allocation2 + $0x8] sm:$0xff] %vm745, 0.0
        %748 = vst.msk [vmem:[#allocation2 + $0x10] sm:$0xff] %vm745, 0.0
        %749 = vst.msk [vmem:[#allocation2 + $0x18] sm:$0xff] %vm745, 0.0
        %750 = vst.msk [vmem:[#allocation2 + $0x20] sm:$0xff] %vm745, 0.0
        %751 = vst.msk [vmem:[#allocation2 + $0x28] sm:$0xff] %vm745, 0.0
        %752 = vst.msk [vmem:[#allocation2 + $0x30] sm:$0xff] %vm745, 0.0
        %753 = vst.msk [vmem:[#allocation2 + $0x38] sm:$0xff] %vm745, 0.0
        %s754 = scalar_lea.vmem [#allocation2], 8
        %vm755 = vcmask 63488
        %756 = vst.msk [vmem:[%s754 + $0x1] sm:$0x7f] %vm755, %v737
        %757 = vst.msk [vmem:[%s754 + $0x9] sm:$0x7f] %vm755, %v738
        %758 = vst.msk [vmem:[%s754 + $0x11] sm:$0x7f] %vm755, %v739
        %759 = vst.msk [vmem:[%s754 + $0x19] sm:$0x7f] %vm755, %v740
        %760 = vst.msk [vmem:[%s754 + $0x21] sm:$0x7f] %vm755, %v741
        %761 = vst.msk [vmem:[%s754 + $0x29] sm:$0x7f] %vm755, %v742
        %762 = vst.msk [vmem:[%s754 + $0x31] sm:$0x7f] %vm755, %v743
        %770 = vrot.lane.b32.xlu0 %v729, 8
        %v771 = vpop.permute.xlu0 %770
        %772 = vrot.lane.b32.xlu0 %v730, 8
        %v773 = vpop.permute.xlu0 %772
        %774 = vrot.lane.b32.xlu0 %v731, 8
        %v775 = vpop.permute.xlu0 %774
        %776 = vrot.lane.b32.xlu0 %v732, 8
        %v777 = vpop.permute.xlu0 %776
        %778 = vrot.lane.b32.xlu0 %v733, 8
        %v779 = vpop.permute.xlu0 %778
        %780 = vrot.lane.b32.xlu0 %v734, 8
        %v781 = vpop.permute.xlu0 %780
        %782 = vrot.lane.b32.xlu0 %v735, 8
        %v783 = vpop.permute.xlu0 %782
        %vm791 = vcmask 130112
        %792 = vst.msk [vmem:[%s754] sm:$0xff] %vm791, %v771
        %793 = vst.msk [vmem:[%s754 + $0x8] sm:$0xff] %vm791, %v773
        %794 = vst.msk [vmem:[%s754 + $0x10] sm:$0xff] %vm791, %v775
        %795 = vst.msk [vmem:[%s754 + $0x18] sm:$0xff] %vm791, %v777
        %796 = vst.msk [vmem:[%s754 + $0x20] sm:$0xff] %vm791, %v779
        %797 = vst.msk [vmem:[%s754 + $0x28] sm:$0xff] %vm791, %v781
        %798 = vst.msk [vmem:[%s754 + $0x30] sm:$0xff] %vm791, %v783
        %806 = vrot.lane.b32.xlu0 %v737, 16
        %v807 = vpop.permute.xlu0 %806
        %808 = vrot.lane.b32.xlu0 %v738, 16
        %v809 = vpop.permute.xlu0 %808
        %810 = vrot.lane.b32.xlu0 %v739, 16
        %v811 = vpop.permute.xlu0 %810
        %812 = vrot.lane.b32.xlu0 %v740, 16
        %v813 = vpop.permute.xlu0 %812
        %814 = vrot.lane.b32.xlu0 %v741, 16
        %v815 = vpop.permute.xlu0 %814
        %816 = vrot.lane.b32.xlu0 %v742, 16
        %v817 = vpop.permute.xlu0 %816
        %818 = vrot.lane.b32.xlu0 %v743, 16
        %v819 = vpop.permute.xlu0 %818
        %vm827 = vcmask 195712
        %828 = vst.msk [vmem:[%s754] sm:$0xff] %vm827, %v807
        %829 = vst.msk [vmem:[%s754 + $0x8] sm:$0xff] %vm827, %v809
        %830 = vst.msk [vmem:[%s754 + $0x10] sm:$0xff] %vm827, %v811
        %831 = vst.msk [vmem:[%s754 + $0x18] sm:$0xff] %vm827, %v813
        %832 = vst.msk [vmem:[%s754 + $0x20] sm:$0xff] %vm827, %v815
        %833 = vst.msk [vmem:[%s754 + $0x28] sm:$0xff] %vm827, %v817
        %834 = vst.msk [vmem:[%s754 + $0x30] sm:$0xff] %vm827, %v819
        %843 = vrot.lane.b32.xlu0 %v721, 24
        %v844 = vpop.permute.xlu0 %843
        %845 = vrot.lane.b32.xlu0 %v722, 24
        %v846 = vpop.permute.xlu0 %845
        %847 = vrot.lane.b32.xlu0 %v723, 24
        %v848 = vpop.permute.xlu0 %847
        %849 = vrot.lane.b32.xlu0 %v724, 24
        %v850 = vpop.permute.xlu0 %849
        %851 = vrot.lane.b32.xlu0 %v725, 24
        %v852 = vpop.permute.xlu0 %851
        %853 = vrot.lane.b32.xlu0 %v726, 24
        %v854 = vpop.permute.xlu0 %853
        %855 = vrot.lane.b32.xlu0 %v727, 24
        %v856 = vpop.permute.xlu0 %855
        %857 = vrot.lane.b32.xlu0 %v728, 24
        %v858 = vpop.permute.xlu0 %857
        %vm867 = vcmask 260288
        %868 = vst.msk [vmem:[#allocation2 + $0x1] sm:$0x7f] %vm867, %v844
        %869 = vst.msk [vmem:[#allocation2 + $0x9] sm:$0x7f] %vm867, %v846
        %870 = vst.msk [vmem:[#allocation2 + $0x11] sm:$0x7f] %vm867, %v848
        %871 = vst.msk [vmem:[#allocation2 + $0x19] sm:$0x7f] %vm867, %v850
        %872 = vst.msk [vmem:[#allocation2 + $0x21] sm:$0x7f] %vm867, %v852
        %873 = vst.msk [vmem:[#allocation2 + $0x29] sm:$0x7f] %vm867, %v854
        %874 = vst.msk [vmem:[#allocation2 + $0x31] sm:$0x7f] %vm867, %v856
        %875 = vst.msk [vmem:[#allocation2 + $0x39] sm:$0x7f] %vm867, %v858
        %877 = vrot.lane.b32.xlu0 %v737, 48
        %v878 = vpop.permute.xlu0 %877
        %879 = vrot.lane.b32.xlu0 %v738, 48
        %v880 = vpop.permute.xlu0 %879
        %881 = vrot.lane.b32.xlu0 %v739, 48
        %v882 = vpop.permute.xlu0 %881
        %883 = vrot.lane.b32.xlu0 %v740, 48
        %v884 = vpop.permute.xlu0 %883
        %885 = vrot.lane.b32.xlu0 %v741, 48
        %v886 = vpop.permute.xlu0 %885
        %887 = vrot.lane.b32.xlu0 %v742, 48
        %v888 = vpop.permute.xlu0 %887
        %889 = vrot.lane.b32.xlu0 %v743, 48
        %v890 = vpop.permute.xlu0 %889
        %891 = vrot.lane.b32.xlu0 %v744, 48
        %v892 = vpop.permute.xlu0 %891
        %vm901 = vcmask 457088
        %902 = vst.msk [vmem:[#allocation2 + $0x1] sm:$0x7f] %vm901, %v878
        %903 = vst.msk [vmem:[#allocation2 + $0x9] sm:$0x7f] %vm901, %v880
        %904 = vst.msk [vmem:[#allocation2 + $0x11] sm:$0x7f] %vm901, %v882
        %905 = vst.msk [vmem:[#allocation2 + $0x19] sm:$0x7f] %vm901, %v884
        %906 = vst.msk [vmem:[#allocation2 + $0x21] sm:$0x7f] %vm901, %v886
        %907 = vst.msk [vmem:[#allocation2 + $0x29] sm:$0x7f] %vm901, %v888
        %908 = vst.msk [vmem:[#allocation2 + $0x31] sm:$0x7f] %vm901, %v890
        %909 = vst.msk [vmem:[#allocation2 + $0x39] sm:$0x7f] %vm901, %v892
        %918 = vrot.lane.b32.xlu0 %v713, 32
        %v919 = vpop.permute.xlu0 %918
        %920 = vrot.lane.b32.xlu0 %v714, 32
        %v921 = vpop.permute.xlu0 %920
        %922 = vrot.lane.b32.xlu0 %v715, 32
        %v923 = vpop.permute.xlu0 %922
        %924 = vrot.lane.b32.xlu0 %v716, 32
        %v925 = vpop.permute.xlu0 %924
        %926 = vrot.lane.b32.xlu0 %v717, 32
        %v927 = vpop.permute.xlu0 %926
        %928 = vrot.lane.b32.xlu0 %v718, 32
        %v929 = vpop.permute.xlu0 %928
        %930 = vrot.lane.b32.xlu0 %v719, 32
        %v931 = vpop.permute.xlu0 %930
        %932 = vrot.lane.b32.xlu0 %v720, 32
        %v933 = vpop.permute.xlu0 %932
        %vm942 = vcmask 326912
        %943 = vst.msk [vmem:[#allocation2] sm:$0xff] %vm942, %v919
        %944 = vst.msk [vmem:[#allocation2 + $0x8] sm:$0xff] %vm942, %v921
        %945 = vst.msk [vmem:[#allocation2 + $0x10] sm:$0xff] %vm942, %v923
        %946 = vst.msk [vmem:[#allocation2 + $0x18] sm:$0xff] %vm942, %v925
        %947 = vst.msk [vmem:[#allocation2 + $0x20] sm:$0xff] %vm942, %v927
        %948 = vst.msk [vmem:[#allocation2 + $0x28] sm:$0xff] %vm942, %v929
        %949 = vst.msk [vmem:[#allocation2 + $0x30] sm:$0xff] %vm942, %v931
        %950 = vst.msk [vmem:[#allocation2 + $0x38] sm:$0xff] %vm942, %v933
        %951 = vrot.lane.b32.xlu0 %v721, 40
        %v952 = vpop.permute.xlu0 %951
        %953 = vrot.lane.b32.xlu0 %v722, 40
        %v954 = vpop.permute.xlu0 %953
        %955 = vrot.lane.b32.xlu0 %v723, 40
        %v956 = vpop.permute.xlu0 %955
        %957 = vrot.lane.b32.xlu0 %v724, 40
        %v958 = vpop.permute.xlu0 %957
        %959 = vrot.lane.b32.xlu0 %v725, 40
        %v960 = vpop.permute.xlu0 %959
        %961 = vrot.lane.b32.xlu0 %v726, 40
        %v962 = vpop.permute.xlu0 %961
        %963 = vrot.lane.b32.xlu0 %v727, 40
        %v964 = vpop.permute.xlu0 %963
        %965 = vrot.lane.b32.xlu0 %v728, 40
        %v966 = vpop.permute.xlu0 %965
        %vm975 = vcmask 392512
        %976 = vst.msk [vmem:[#allocation2] sm:$0xff] %vm975, %v952
        %977 = vst.msk [vmem:[#allocation2 + $0x8] sm:$0xff] %vm975, %v954
        %978 = vst.msk [vmem:[#allocation2 + $0x10] sm:$0xff] %vm975, %v956
        %979 = vst.msk [vmem:[#allocation2 + $0x18] sm:$0xff] %vm975, %v958
        %980 = vst.msk [vmem:[#allocation2 + $0x20] sm:$0xff] %vm975, %v960
        %981 = vst.msk [vmem:[#allocation2 + $0x28] sm:$0xff] %vm975, %v962
        %982 = vst.msk [vmem:[#allocation2 + $0x30] sm:$0xff] %vm975, %v964
        %983 = vst.msk [vmem:[#allocation2 + $0x38] sm:$0xff] %vm975, %v966
        %985 = vrot.lane.b32.xlu0 %v729, 56
        %v986 = vpop.permute.xlu0 %985
        %987 = vrot.lane.b32.xlu0 %v730, 56
        %v988 = vpop.permute.xlu0 %987
        %989 = vrot.lane.b32.xlu0 %v731, 56
        %v990 = vpop.permute.xlu0 %989
        %991 = vrot.lane.b32.xlu0 %v732, 56
        %v992 = vpop.permute.xlu0 %991
        %993 = vrot.lane.b32.xlu0 %v733, 56
        %v994 = vpop.permute.xlu0 %993
        %995 = vrot.lane.b32.xlu0 %v734, 56
        %v996 = vpop.permute.xlu0 %995
        %997 = vrot.lane.b32.xlu0 %v735, 56
        %v998 = vpop.permute.xlu0 %997
        %999 = vrot.lane.b32.xlu0 %v736, 56
        %v1000 = vpop.permute.xlu0 %999
        %vm1009 = vcmask 523712
        %1010 = vst.msk [vmem:[#allocation2] sm:$0xff] %vm1009, %v986
        %1011 = vst.msk [vmem:[#allocation2 + $0x8] sm:$0xff] %vm1009, %v988
        %1012 = vst.msk [vmem:[#allocation2 + $0x10] sm:$0xff] %vm1009, %v990
        %1013 = vst.msk [vmem:[#allocation2 + $0x18] sm:$0xff] %vm1009, %v992
        %1014 = vst.msk [vmem:[#allocation2 + $0x20] sm:$0xff] %vm1009, %v994
        %1015 = vst.msk [vmem:[#allocation2 + $0x28] sm:$0xff] %vm1009, %v996
        %1016 = vst.msk [vmem:[#allocation2 + $0x30] sm:$0xff] %vm1009, %v998
        %1017 = vst.msk [vmem:[#allocation2 + $0x38] sm:$0xff] %vm1009, %v1000
        %1018 = vrot.lane.b32.xlu0 %v737, 64
        %v1019 = vpop.permute.xlu0 %1018
        %1020 = vrot.lane.b32.xlu0 %v738, 64
        %v1021 = vpop.permute.xlu0 %1020
        %1022 = vrot.lane.b32.xlu0 %v739, 64
        %v1023 = vpop.permute.xlu0 %1022
        %1024 = vrot.lane.b32.xlu0 %v740, 64
        %v1025 = vpop.permute.xlu0 %1024
        %1026 = vrot.lane.b32.xlu0 %v741, 64
        %v1027 = vpop.permute.xlu0 %1026
        %1028 = vrot.lane.b32.xlu0 %v742, 64
        %v1029 = vpop.permute.xlu0 %1028
        %1030 = vrot.lane.b32.xlu0 %v743, 64
        %v1031 = vpop.permute.xlu0 %1030
        %1032 = vrot.lane.b32.xlu0 %v744, 64
        %v1033 = vpop.permute.xlu0 %1032
        %vm1042 = vcmask 589312
        %1043 = vst.msk [vmem:[#allocation2] sm:$0xff] %vm1042, %v1019
        %1044 = vst.msk [vmem:[#allocation2 + $0x8] sm:$0xff] %vm1042, %v1021
        %1045 = vst.msk [vmem:[#allocation2 + $0x10] sm:$0xff] %vm1042, %v1023
        %1046 = vst.msk [vmem:[#allocation2 + $0x18] sm:$0xff] %vm1042, %v1025
        %1047 = vst.msk [vmem:[#allocation2 + $0x20] sm:$0xff] %vm1042, %v1027
        %1048 = vst.msk [vmem:[#allocation2 + $0x28] sm:$0xff] %vm1042, %v1029
        %1049 = vst.msk [vmem:[#allocation2 + $0x30] sm:$0xff] %vm1042, %v1031
        %1050 = vst.msk [vmem:[#allocation2 + $0x38] sm:$0xff] %vm1042, %v1033
        %v1051 = vld [vmem:[#allocation2] sm:$0xff]
        %v1052 = vld [vmem:[#allocation2 + $0x8] sm:$0xff]
        %v1053 = vld [vmem:[#allocation2 + $0x10] sm:$0xff]
        %v1054 = vld [vmem:[#allocation2 + $0x18] sm:$0xff]
        %v1055 = vld [vmem:[#allocation2 + $0x20] sm:$0xff]
        %v1056 = vld [vmem:[#allocation2 + $0x28] sm:$0xff]
        %v1057 = vld [vmem:[#allocation2 + $0x30] sm:$0xff]
        %v1058 = vld [vmem:[#allocation2 + $0x38] sm:$0xff]
        %v1059 = vpack.c.bf16 %v1052, %v1051
        %v1060 = vpack.c.bf16 %v1054, %v1053
        %v1061 = vpack.c.bf16 %v1056, %v1055
        %v1062 = vpack.c.bf16 %v1058, %v1057
        %v1063 = vld [vmem:[%s7] sm:$0xff]
        %v1064 = vld [vmem:[%s7 + $0x8] sm:$0xff]
        %v1065 = vld [vmem:[%s7 + $0x10] sm:$0xff]
        %v1066 = vld [vmem:[%s7 + $0x18] sm:$0xff]
        %v1067 = vld [vmem:[%s7 + $0x20] sm:$0xff]
        %v1068 = vld [vmem:[%s7 + $0x28] sm:$0xff]
        %v1069 = vld [vmem:[%s7 + $0x30] sm:$0xff]
        %v1070 = vld [vmem:[%s7 + $0x38] sm:$0xff]
        %v1071 = vld [vmem:[%s7 + $0x40] sm:$0xff]
        %v1072 = vpack.c.bf16 %v1064, %v1063
        %v1073 = vpack.c.bf16 %v1066, %v1065
        %v1074 = vpack.c.bf16 %v1068, %v1067
        %v1075 = vpack.c.bf16 %v1070, %v1069
        %v1076 = vpack.c.bf16 %v1071, %v1071
        %v1078 = vsel %vm745, %v1059, 0
        %v1081 = vsel %vm745, %v1060, 0
        %v1084 = vsel %vm745, %v1061, 0
        %v1087 = vsel %vm745, %v1062, 0
        %vm1089 = vcmask 1043456
        %v1091 = vsel %vm1089, %v1076, 0
        %1093 = vmatprep.subr.bf16.mxu0 0
        %1094 = vmatpush1.bf16.msra.mxu0 %v1072
        %1095 = vmatprep.subr.bf16.mxu0 0
        %1096 = vmatpush1.bf16.msra.mxu0 %v1073
        %1097 = vmatprep.subr.bf16.mxu0 0
        %1098 = vmatpush1.bf16.msra.mxu0 %v1074
        %1099 = vmatprep.subr.bf16.mxu0 0
        %1100 = vmatpush1.bf16.msra.mxu0 %v1075
        %1101 = vmatprep.subr.bf16.mxu0 0
        %1102 = vmatpush1.bf16.msra.mxu0 %v1091
        %1103 = vmatprep.subr.bf16.mxu0 0
        %1104 = vmatpush1.bf16.msra.mxu0 0
        %1105 = vmatprep.subr.bf16.mxu0 0
        %1106 = vmatpush1.bf16.msra.mxu0 0
        %1107 = vmatprep.subr.bf16.mxu0 0
        %1108 = vmatpush1.bf16.msra.mxu0 0
        %1109 = vmatprep.subr.bf16.mxu0 0
        %1110 = vmatpush1.bf16.msra.mxu0 0
        %1111 = vmatprep.subr.bf16.mxu0 0
        %1112 = vmatpush1.bf16.msra.mxu0 0
        %1113 = vmatprep.subr.bf16.mxu0 0
        %1114 = vmatpush1.bf16.msra.mxu0 0
        %1115 = vmatprep.subr.bf16.mxu0 0
        %1116 = vmatpush1.bf16.msra.mxu0 0
        %1117 = vmatprep.subr.bf16.mxu0 0
        %1118 = vmatpush1.bf16.msra.mxu0 0
        %1119 = vmatprep.subr.bf16.mxu0 0
        %1120 = vmatpush1.bf16.msra.mxu0 0
        %1121 = vmatprep.subr.bf16.mxu0 0
        %1122 = vmatpush1.bf16.msra.mxu0 0
        %1123 = vmatprep.subr.bf16.mxu0 0
        %1124 = vmatpush1.bf16.msra.mxu0 0
        %1125 = vmatprep.mubr.bf16.mxu0 0
        %1126 = vmatmul.mubr.bf16.gmra.mrb[0].mxu0 %v1078
        %v1127 = vpop.f32.mrb[0].mxu0
        %v1128 = vadd.f32 0.0, %v1127
        %v1129 = vpop.f32.mrb[0].mxu0
        %v1130 = vpop.f32.mrb[0].mxu0
        %v1131 = vadd.f32 0.0, %v1130
        %v1132 = vpop.f32.mrb[0].mxu0
        %1133 = vmatprep.mubr.bf16.mxu0 0
        %1134 = vmatmul.mubr.bf16.gmra.mrb[0].mxu0 %v1081
        %v1135 = vpop.f32.mrb[0].mxu0
        %v1136 = vadd.f32 0.0, %v1135
        %v1137 = vpop.f32.mrb[0].mxu0
        %v1138 = vpop.f32.mrb[0].mxu0
        %v1139 = vadd.f32 0.0, %v1138
        %v1140 = vpop.f32.mrb[0].mxu0
        %1141 = vmatprep.mubr.bf16.mxu0 0
        %1142 = vmatmul.mubr.bf16.gmra.mrb[0].mxu0 %v1084
        %v1143 = vpop.f32.mrb[0].mxu0
        %v1144 = vadd.f32 0.0, %v1143
        %v1145 = vpop.f32.mrb[0].mxu0
        %v1146 = vpop.f32.mrb[0].mxu0
        %v1147 = vadd.f32 0.0, %v1146
        %v1148 = vpop.f32.mrb[0].mxu0
        %1149 = vmatprep.mubr.bf16.mxu0 0
        %1150 = vmatmul.mubr.bf16.gmra.mrb[0].mxu0 %v1087
        %v1151 = vpop.f32.mrb[0].mxu0
        %v1152 = vadd.f32 0.0, %v1151
        %v1153 = vpop.f32.mrb[0].mxu0
        %v1154 = vpop.f32.mrb[0].mxu0
        %v1155 = vadd.f32 0.0, %v1154
        %v1156 = vpop.f32.mrb[0].mxu0
        %1157 = vdwg.mxu0
        %v1158 = vmax.f32 %v332, %v340
        %v1159 = vmax.f32 %v333, %v341
        %v1160 = vmax.f32 %v334, %v342
        %v1161 = vmax.f32 %v335, %v343
        %v1162 = vmax.f32 %v336, %v344
        %v1163 = vmax.f32 %v337, %v345
        %v1164 = vmax.f32 %v338, %v346
        %v1165 = vmax.f32 %v339, %v347
        %v1166 = vmax.f32 %v348, %v356
        %v1167 = vmax.f32 %v349, %v357
        %v1168 = vmax.f32 %v350, %v358
        %v1169 = vmax.f32 %v351, %v359
        %v1170 = vmax.f32 %v352, %v360
        %v1171 = vmax.f32 %v353, %v361
        %v1172 = vmax.f32 %v354, %v362
        %v1173 = vmax.f32 %v355, %v363
        %v1174 = vmax.f32 %v1158, %v1166
        %v1175 = vmax.f32 %v1159, %v1167
        %v1176 = vmax.f32 %v1160, %v1168
        %v1177 = vmax.f32 %v1161, %v1169
        %v1178 = vmax.f32 %v1162, %v1170
        %v1179 = vmax.f32 %v1163, %v1171
        %v1180 = vmax.f32 %v1164, %v1172
        %v1181 = vmax.f32 %v1165, %v1173
        %v1182 = vld [vmem:[%s4] sm:$0x1]
        %v1184 = vlaneseq
        %v1185 = vshrl.u32 %v1184, 7
        %v1186 = vsub.s32 0, %v1185
        %v1187 = vrot.slane %v1182, %v1186
        %v1189 = vmul.f32 %v1174, %v1187
        %v1190 = vmul.f32 %v1175, %v1187
        %v1191 = vmul.f32 %v1176, %v1187
        %v1192 = vmul.f32 %v1177, %v1187
        %v1193 = vmul.f32 %v1178, %v1187
        %v1194 = vmul.f32 %v1179, %v1187
        %v1195 = vmul.f32 %v1180, %v1187
        %v1196 = vmul.f32 %v1181, %v1187
        %v1197 = vld [vmem:[%s5] sm:$0x1]
        %v1199 = vlaneseq
        %v1200 = vshrl.u32 %v1199, 7
        %v1201 = vsub.s32 0, %v1200
        %v1202 = vrot.slane %v1197, %v1201
        %v1204 = vadd.f32 %v1189, %v1202
        %v1205 = vadd.f32 %v1190, %v1202
        %v1206 = vadd.f32 %v1191, %v1202
        %v1207 = vadd.f32 %v1192, %v1202
        %v1208 = vadd.f32 %v1193, %v1202
        %v1209 = vadd.f32 %v1194, %v1202
        %v1210 = vadd.f32 %v1195, %v1202
        %v1211 = vadd.f32 %v1196, %v1202
        %v1212 = vmax.f32 %v1204, 0.0
        %v1213 = vmax.f32 %v1205, 0.0
        %v1214 = vmax.f32 %v1206, 0.0
        %v1215 = vmax.f32 %v1207, 0.0
        %v1216 = vmax.f32 %v1208, 0.0
        %v1217 = vmax.f32 %v1209, 0.0
        %v1218 = vmax.f32 %v1210, 0.0
        %v1219 = vmax.f32 %v1211, 0.0
        %v1220 = vpack.c.bf16 %v1213, %v1212
        %v1221 = vpack.c.bf16 %v1215, %v1214
        %v1222 = vpack.c.bf16 %v1217, %v1216
        %v1223 = vpack.c.bf16 %v1219, %v1218
        %v1224 = vld [vmem:[%s8] sm:$0xf]
        %v1225 = vpack.c.bf16 %v1224, %v1224
        %v1227 = vsel %vm499, %v1220, 0
        %v1230 = vsel %vm499, %v1221, 0
        %v1233 = vsel %vm499, %v1222, 0
        %v1236 = vsel %vm499, %v1223, 0
        %v1239 = vsel %vm548, %v1225, 0
        %1241 = vmatprep.subr.bf16.mxu0 0
        %1242 = vmatpush1.bf16.msra.mxu0 %v1239
        %1243 = vmatprep.subr.bf16.mxu0 0
        %1244 = vmatpush1.bf16.msra.mxu0 0
        %1245 = vmatprep.subr.bf16.mxu0 0
        %1246 = vmatpush1.bf16.msra.mxu0 0
        %1247 = vmatprep.subr.bf16.mxu0 0
        %1248 = vmatpush1.bf16.msra.mxu0 0
        %1249 = vmatprep.subr.bf16.mxu0 0
        %1250 = vmatpush1.bf16.msra.mxu0 0
        %1251 = vmatprep.subr.bf16.mxu0 0
        %1252 = vmatpush1.bf16.msra.mxu0 0
        %1253 = vmatprep.subr.bf16.mxu0 0
        %1254 = vmatpush1.bf16.msra.mxu0 0
        %1255 = vmatprep.subr.bf16.mxu0 0
        %1256 = vmatpush1.bf16.msra.mxu0 0
        %1257 = vmatprep.subr.bf16.mxu0 0
        %1258 = vmatpush1.bf16.msra.mxu0 0
        %1259 = vmatprep.subr.bf16.mxu0 0
        %1260 = vmatpush1.bf16.msra.mxu0 0
        %1261 = vmatprep.subr.bf16.mxu0 0
        %1262 = vmatpush1.bf16.msra.mxu0 0
        %1263 = vmatprep.subr.bf16.mxu0 0
        %1264 = vmatpush1.bf16.msra.mxu0 0
        %1265 = vmatprep.subr.bf16.mxu0 0
        %1266 = vmatpush1.bf16.msra.mxu0 0
        %1267 = vmatprep.subr.bf16.mxu0 0
        %1268 = vmatpush1.bf16.msra.mxu0 0
        %1269 = vmatprep.subr.bf16.mxu0 0
        %1270 = vmatpush1.bf16.msra.mxu0 0
        %1271 = vmatprep.subr.bf16.mxu0 0
        %1272 = vmatpush1.bf16.msra.mxu0 0
        %1273 = vmatprep.mubr.bf16.mxu0 0
        %1274 = vmatmul.mubr.bf16.gmra.mrb[0].mxu0 %v1227
        %v1275 = vpop.f32.mrb[0].mxu0
        %v1276 = vadd.f32 0.0, %v1275
        %v1277 = vpop.f32.mrb[0].mxu0
        %v1278 = vpop.f32.mrb[0].mxu0
        %v1279 = vadd.f32 0.0, %v1278
        %v1280 = vpop.f32.mrb[0].mxu0
        %1281 = vmatprep.mubr.bf16.mxu0 0
        %1282 = vmatmul.mubr.bf16.gmra.mrb[0].mxu0 %v1230
        %v1283 = vpop.f32.mrb[0].mxu0
        %v1284 = vadd.f32 0.0, %v1283
        %v1285 = vpop.f32.mrb[0].mxu0
        %v1286 = vpop.f32.mrb[0].mxu0
        %v1287 = vadd.f32 0.0, %v1286
        %v1288 = vpop.f32.mrb[0].mxu0
        %1289 = vmatprep.mubr.bf16.mxu0 0
        %1290 = vmatmul.mubr.bf16.gmra.mrb[0].mxu0 %v1233
        %v1291 = vpop.f32.mrb[0].mxu0
        %v1292 = vadd.f32 0.0, %v1291
        %v1293 = vpop.f32.mrb[0].mxu0
        %v1294 = vpop.f32.mrb[0].mxu0
        %v1295 = vadd.f32 0.0, %v1294
        %v1296 = vpop.f32.mrb[0].mxu0
        %1297 = vmatprep.mubr.bf16.mxu0 0
        %1298 = vmatmul.mubr.bf16.gmra.mrb[0].mxu0 %v1236
        %v1299 = vpop.f32.mrb[0].mxu0
        %v1300 = vadd.f32 0.0, %v1299
        %v1301 = vpop.f32.mrb[0].mxu0
        %v1302 = vpop.f32.mrb[0].mxu0
        %v1303 = vadd.f32 0.0, %v1302
        %v1304 = vpop.f32.mrb[0].mxu0
        %1305 = vdwg.mxu0
        %vm1306 = vcmask 64512
        %1307 = vst.msk [vmem:[%s325] sm:$0xff] %vm1306, %v1128
        %1308 = vst.msk [vmem:[%s325 + $0x8] sm:$0xff] %vm1306, %v1131
        %1309 = vst.msk [vmem:[%s325 + $0x10] sm:$0xff] %vm1306, %v1136
        %1310 = vst.msk [vmem:[%s325 + $0x18] sm:$0xff] %vm1306, %v1139
        %1311 = vst.msk [vmem:[%s325 + $0x20] sm:$0xff] %vm1306, %v1144
        %1312 = vst.msk [vmem:[%s325 + $0x28] sm:$0xff] %vm1306, %v1147
        %1313 = vst.msk [vmem:[%s325 + $0x30] sm:$0xff] %vm1306, %v1152
        %1314 = vst.msk [vmem:[%s325 + $0x38] sm:$0xff] %vm1306, %v1155
        %1323 = vrot.lane.b32.xlu0 %v1276, 8
        %v1324 = vpop.permute.xlu0 %1323
        %1325 = vrot.lane.b32.xlu0 %v1279, 8
        %v1326 = vpop.permute.xlu0 %1325
        %1327 = vrot.lane.b32.xlu0 %v1284, 8
        %v1328 = vpop.permute.xlu0 %1327
        %1329 = vrot.lane.b32.xlu0 %v1287, 8
        %v1330 = vpop.permute.xlu0 %1329
        %1331 = vrot.lane.b32.xlu0 %v1292, 8
        %v1332 = vpop.permute.xlu0 %1331
        %1333 = vrot.lane.b32.xlu0 %v1295, 8
        %v1334 = vpop.permute.xlu0 %1333
        %1335 = vrot.lane.b32.xlu0 %v1300, 8
        %v1336 = vpop.permute.xlu0 %1335
        %1337 = vrot.lane.b32.xlu0 %v1303, 8
        %v1338 = vpop.permute.xlu0 %1337
        %1347 = vst.msk [vmem:[%s325] sm:$0xff] %vm791, %v1324
        %1348 = vst.msk [vmem:[%s325 + $0x8] sm:$0xff] %vm791, %v1326
        %1349 = vst.msk [vmem:[%s325 + $0x10] sm:$0xff] %vm791, %v1328
        %1350 = vst.msk [vmem:[%s325 + $0x18] sm:$0xff] %vm791, %v1330
        %1351 = vst.msk [vmem:[%s325 + $0x20] sm:$0xff] %vm791, %v1332
        %1352 = vst.msk [vmem:[%s325 + $0x28] sm:$0xff] %vm791, %v1334
        %1353 = vst.msk [vmem:[%s325 + $0x30] sm:$0xff] %vm791, %v1336
        %1354 = vst.msk [vmem:[%s325 + $0x38] sm:$0xff] %vm791, %v1338
        %s1355 = sand.u32 %s225, 1
        %s1356 = scalar_lea.sflag [#allocation4], %s1355
        %s1357 = sand.u32 %s225, 1
        %s1358 = smul.addr %s1357, 64
        %s1359 = scalar_lea.vmem [#allocation3], %s1358
        // Predicated region
        $region57: #{single_layer2_forward.1} parent=55 // pred_check
          %p1360 = pneg %p235
        $region58: #{single_layer2_forward.1} parent=55 // pred_check_branch
          %1362 = sbr.rel (%p1360) target = $region60
        $region59: #{single_layer2_forward.1} parent=55 // pred_region
          %s1364 = ssub.s32 1024, 1024
          %1365 = vsyncadd %s1356, %s1364
          %s1366 = smul.addr %s23, 8
          %s1367 = smul.addr %s1366, 128
          %s1368 = scalar_lea.hbm %s9, %s1367
          %s1369 = sshll.u32 %s1359, 4
          %s1370 = int_to_ptr.vmem [resolvable:$true] %s1369
          %1375 = dma.vmem_to_hbm [thread:$0]  %s1370, 1024, %s1368, %s1356, 128, 128, 8
        $region60: #{single_layer2_forward.1} parent=55 // pred_fallthru
          _
      $region56: #{single_layer2_forward.1} parent=5 // pred_fallthru
        _
      %p1376 = scmp.le.s32.totalorder 2, %s18
      // Predicated region
      $region61: #{single_layer2_forward.1} parent=5 // pred_check
        %p1377 = pneg %p1376
      $region62: #{single_layer2_forward.1} parent=5 // pred_check_branch
        %1379 = sbr.rel (%p1377) target = $region64
      $region63: #{single_layer2_forward.1} parent=5 // pred_region
        %s1380 = ssub.s32 %s18, 2
        // Predicated region
        $region65: #{single_layer2_forward.1} parent=63 // pred_check
          %p1381 = pneg %p241
        $region66: #{single_layer2_forward.1} parent=63 // pred_check_branch
          %1383 = sbr.rel (%p1381) target = $region68
        $region67: #{single_layer2_forward.1} parent=63 // pred_region
          %s1384 = sand.u32 %s226, 1
          %s1385 = scalar_lea.sflag [#allocation4], %s1384
          %s1386 = sand.u32 %s226, 1
          %s1387 = smul.addr %s1386, 64
          %s1388 = scalar_lea.vmem [#allocation3], %s1387
          %1389 = dma.done %s1385, 1024
        $region68: #{single_layer2_forward.1} parent=63 // pred_fallthru
          _
      $region64: #{single_layer2_forward.1} parent=5 // pred_fallthru
        _
    $region6: #{single_layer2_forward.1} parent=1 // loop_footer
      %s22 = sadd.s32 1, %s18
    $region7: #{single_layer2_forward.1} parent=1 // loop_footer_branch
      %17 = sbr.rel target = $region3
    $region8: #{single_layer2_forward.1} parent=1 // loop_exit
      _
    %1390 = vsyncpa [#allocation4], 1
    %s1391 = scalar_lea.sflag [#allocation4], 1
    %1392 = vsyncpa %s1391, 1

</llo_original>
